<compile_context>
chip_gen: v7x
topology: tpu7x:2x2x1
jax: 0.10.0
libtpu: 0.0.40
codegen_flags: <defaults>
</compile_context>

<pallas_src>
import math
import functools

import jax
import jax.numpy as jnp
from jax import lax
from jax.experimental import pallas as pl
from jax.experimental.pallas import tpu as pltpu


def _round_up(v, m):
    return ((v + m - 1) // m) * m


def _tensorcores_per_chip():
    """v7x has 2 TensorCores per chip; v5e/v6e have 1. Conservative fallback: 1."""
    try:
        kind = jax.devices()[0].device_kind.lower()
    except Exception:
        return 1
    return 2 if ("v7" in kind or "7x" in kind) else 1


def _gemm_scale_hardtanh_gelu_kernel(
    x_ref, w_ref, b_ref, o_ref,
    *, scaling_factor, hardtanh_min, hardtanh_max, n_k,
):
    """Computes one (tm, tn) output tile.

    w_ref is the pre-transposed weight tile (tk, tn), so jnp.dot is the
    canonical (M,K)x(K,N) MXU form.  For n_k > 1 the f32 output block is
    resident across the innermost ('arbitrary') k axis and accumulated in
    place — this relies on the out_spec index_map being k-invariant.
    """
    inv_sqrt2 = 1.0 / math.sqrt(2.0)

    def _epilogue(acc):
        y = acc + b_ref[...]                           # bias add (f32)
        y = y * scaling_factor                         # scaling
        y = jnp.clip(y, hardtanh_min, hardtanh_max)    # hardtanh
        # Exact (erf-based) GELU — matches torch.nn.functional.gelu default.
        return 0.5 * y * (1.0 + lax.erf(y * inv_sqrt2))

    part = jnp.dot(x_ref[...], w_ref[...], preferred_element_type=jnp.float32)

    if n_k == 1:
        # Single reduction step: one-shot store, no zero-init / RMW.
        o_ref[...] = _epilogue(part)
    else:
        k = pl.program_id(2)
        last = pl.num_programs(2) - 1

        @pl.when(k == 0)
        def _():
            o_ref[...] = part

        @pl.when(jnp.logical_and(k > 0, k < last))
        def _():
            o_ref[...] += part

        @pl.when(k == last)
        def _():
            o_ref[...] = _epilogue(o_ref[...] + part)


def make_gemm_scale_hardtanh_gelu(
    weight, bias, scaling_factor, hardtanh_min, hardtanh_max,
    *, param_dtype=jnp.float32,
):
    """One-time prep of static params (transpose / pad / cast hoisted out of
    the hot path).  Returns a jitted `forward(x)`.

    weight: (N, K) PyTorch nn.Linear layout, bias: (N,), x: (B, K).
    param_dtype=jnp.bfloat16 halves the dominant HBM stream (weight read) at
    the cost of breaking the 1e-5 accuracy tolerance — accumulate stays f32.
    """
    weight = jnp.asarray(weight)
    bias = jnp.asarray(bias)
    N, K = weight.shape
    assert bias.shape == (N,), "bias must be (out_features,)"

    num_tc = _tensorcores_per_chip()

    # ---- tile choices (depend only on K, N, chip) ----
    tk = K if K <= 1024 else 512
    if num_tc >= 2 and N >= 256:
        # >=2 lane-dense N blocks so both v7x TensorCores get work.
        tn = 256 if N >= 512 else 128
    else:
        # Single TensorCore (v5e/v6e): fewest grid steps along N.
        tn = min(_round_up(N, 128), 512)
    Kp = _round_up(K, tk)
    Np = _round_up(N, tn)
    n_k = Kp // tk

    # ---- one-time weight / bias preparation (NOT per forward call) ----
    w_t = weight.astype(jnp.float32).T                # (K, N) canonical RHS
    if (Kp, Np) != (K, N):
        # Zero-padding K keeps the dot exact; padded N cols are sliced off.
        w_t = jnp.pad(w_t, ((0, Kp - K), (0, Np - N)))
    w_t = jax.device_put(w_t.astype(param_dtype))
    b_p = bias.astype(jnp.float32)
    if Np != N:
        b_p = jnp.pad(b_p, (0, Np - N))
    b_p = jax.device_put(b_p.reshape(1, Np))

    kernel = functools.partial(
        _gemm_scale_hardtanh_gelu_kernel,
        scaling_factor=float(scaling_factor),
        hardtanh_min=float(hardtanh_min),
        hardtanh_max=float(hardtanh_max),
        n_k=n_k,
    )

    @jax.jit
    def forward(x):
        B, Kx = x.shape
        assert Kx == K, "x inner dim must match weight in_features"

        # Tile along M; on dual-TC chips with N too small for 2 lane-dense
        # N blocks, split along M instead so both cores stay busy.
        tm = min(_round_up(max(B, 1), 8), 256)
        if num_tc >= 2 and N < 256 and B >= 16:
            tm = _round_up(-(-B // 2), 8)
        Bp = _round_up(B, tm)

        xp = x.astype(param_dtype)  # no-op for f32 params + f32 input
        if (Bp, Kp) != (B, K):
            xp = jnp.pad(xp, ((0, Bp - B), (0, Kp - K)))

        itemsize = jnp.dtype(param_dtype).itemsize
        cost = pl.CostEstimate(
            flops=2 * Bp * Np * Kp,
            transcendentals=Bp * Np,                       # erf per output elem
            bytes_accessed=(Bp * Kp + Np * Kp) * itemsize  # x + weight reads
                           + 4 * Np + 4 * Bp * Np,         # bias read + out write
        )

        out = pl.pallas_call(
            kernel,
            out_shape=jax.ShapeDtypeStruct((Bp, Np), jnp.float32),
            grid_spec=pltpu.PrefetchScalarGridSpec(
                num_scalar_prefetch=0,
                grid=(Bp // tm, Np // tn, n_k),
                in_specs=[
                    pl.BlockSpec((tm, tk), lambda i, j, k: (i, k)),   # x tile
                    pl.BlockSpec((tk, tn), lambda i, j, k: (k, j)),   # weight^T tile
                    pl.BlockSpec((1, tn), lambda i, j, k: (0, j)),    # bias (k-invariant)
                ],
                out_specs=pl.BlockSpec((tm, tn), lambda i, j, k: (i, j)),
            ),
            compiler_params=pltpu.CompilerParams(
                # k MUST stay innermost & 'arbitrary': the output block is
                # k-resident and accumulated in place when n_k > 1.
                dimension_semantics=("parallel", "parallel", "arbitrary"),
            ),
            cost_estimate=cost,
        )(xp, w_t, b_p)

        if (Bp, Np) != (B, N):
            out = out[:B, :N]
        return out

    return forward


def _reference(x, weight, bias, scaling_factor, hardtanh_min, hardtanh_max):
    y = jnp.dot(x, weight.T, precision=lax.Precision.HIGHEST) + bias
    y = y * scaling_factor
    y = jnp.clip(y, hardtanh_min, hardtanh_max)
    return jax.nn.gelu(y, approximate=False)


if __name__ == "__main__":
    # Shapes consistent with the module (small batch).
    batch = 64
    in_features = 1024
    out_features = 512
    scaling_factor = 0.5
    hardtanh_min = -2.0
    hardtanh_max = 2.0

    key = jax.random.PRNGKey(0)
    kx, kw, kb = jax.random.split(key, 3)

    # Deterministic nn.Linear-style init: U(-1/sqrt(in), 1/sqrt(in)).
    bound = 1.0 / math.sqrt(in_features)
    weight = jax.random.uniform(
        kw, (out_features, in_features), jnp.float32, -bound, bound
    )
    bias = jax.random.uniform(kb, (out_features,), jnp.float32, -bound, bound)
    x = jax.random.normal(kx, (batch, in_features), jnp.float32)

    forward = make_gemm_scale_hardtanh_gelu(
        weight, bias, scaling_factor, hardtanh_min, hardtanh_max
    )
    out = jax.block_until_ready(forward(x))

    ref = _reference(x, weight, bias, scaling_factor, hardtanh_min, hardtanh_max)
    assert out.shape == (batch, out_features)
    assert jnp.allclose(out, ref, atol=1e-5, rtol=1e-5), "mismatch vs reference"

    print("KERNEL_OK")
</pallas_src>

<mosaic_0001>
module attributes {stable_mosaic.version = 11 : i64} {
  func.func @_gemm_scale_hardtanh_gelu_kernel(%arg0: i32, %arg1: i32, %arg2: i32, %arg3: memref<64x1024xf32, #tpu.memory_space<vmem>>, %arg4: memref<1024x512xf32, #tpu.memory_space<vmem>>, %arg5: memref<1x512xf32, #tpu.memory_space<vmem>>, %arg6: memref<64x512xf32, #tpu.memory_space<vmem>>) attributes {dimension_semantics = [#tpu.dimension_semantics<parallel>, #tpu.dimension_semantics<parallel>, #tpu.dimension_semantics<arbitrary>], iteration_bounds = array<i64: 1, 1, 1>, scalar_prefetch = 0 : i64, scratch_operands = 0 : i64, tpu.core_type = #tpu.core_type<tc>, window_params = [{transform_indices = @transform_0, window_bounds = array<i64: 64, 1024>}, {transform_indices = @transform_1, window_bounds = array<i64: 1024, 512>}, {transform_indices = @transform_2, window_bounds = array<i64: 1, 512>}, {transform_indices = @transform_3, window_bounds = array<i64: 64, 512>}]} {
    %c0 = arith.constant 0 : index
    %c0_0 = arith.constant 0 : index
    %0 = vector.load %arg3[%c0, %c0_0] : memref<64x1024xf32, #tpu.memory_space<vmem>>, vector<64x1024xf32>
    %c0_1 = arith.constant 0 : index
    %c0_2 = arith.constant 0 : index
    %1 = vector.load %arg4[%c0_1, %c0_2] : memref<1024x512xf32, #tpu.memory_space<vmem>>, vector<1024x512xf32>
    %cst = arith.constant dense<0.000000e+00> : vector<64x512xf32>
    %2 = tpu.matmul %0, %1, %cst {dimension_numbers = #tpu.dot_dimension_numbers<[1], [0], [0], [1], [0, 0, 1, 1], [], []>} : vector<64x1024xf32>, vector<1024x512xf32>, vector<64x512xf32> -> vector<64x512xf32>
    %c0_3 = arith.constant 0 : index
    %c0_4 = arith.constant 0 : index
    %3 = vector.load %arg5[%c0_3, %c0_4] : memref<1x512xf32, #tpu.memory_space<vmem>>, vector<1x512xf32>
    %4 = vector.broadcast %3 : vector<1x512xf32> to vector<64x512xf32>
    %5 = arith.addf %2, %4 : vector<64x512xf32>
    %cst_5 = arith.constant 5.000000e-01 : f32
    %6 = vector.broadcast %cst_5 : f32 to vector<64x512xf32>
    %7 = arith.mulf %5, %6 : vector<64x512xf32>
    %cst_6 = arith.constant -2.000000e+00 : f32
    %cst_7 = arith.constant 2.000000e+00 : f32
    %8 = vector.broadcast %cst_6 : f32 to vector<64x512xf32>
    %9 = arith.maximumf %8, %7 : vector<64x512xf32>
    %10 = vector.broadcast %cst_7 : f32 to vector<64x512xf32>
    %11 = arith.minimumf %10, %9 : vector<64x512xf32>
    %cst_8 = arith.constant 5.000000e-01 : f32
    %12 = vector.broadcast %cst_8 : f32 to vector<64x512xf32>
    %13 = arith.mulf %12, %11 : vector<64x512xf32>
    %cst_9 = arith.constant 0.707106769 : f32
    %14 = vector.broadcast %cst_9 : f32 to vector<64x512xf32>
    %15 = arith.mulf %11, %14 : vector<64x512xf32>
    %16 = math.erf %15 : vector<64x512xf32>
    %cst_10 = arith.constant 1.000000e+00 : f32
    %17 = vector.broadcast %cst_10 : f32 to vector<64x512xf32>
    %18 = arith.addf %17, %16 : vector<64x512xf32>
    %19 = arith.mulf %13, %18 : vector<64x512xf32>
    %c0_11 = arith.constant 0 : index
    %c0_12 = arith.constant 0 : index
    %20 = vector.load %arg6[%c0_11, %c0_12] : memref<64x512xf32, #tpu.memory_space<vmem>>, vector<64x512xf32>
    tpu.vector_store %arg6[%c0_11, %c0_12], %19 {strides = array<i32>} : memref<64x512xf32, #tpu.memory_space<vmem>>, vector<64x512xf32>,
    return
  }
  func.func @transform_0(%arg0: i32, %arg1: i32, %arg2: i32) -> (i32, i32) {
    %c0_i32 = arith.constant 0 : i32
    return %arg0, %arg2 : i32, i32
  }
  func.func @transform_1(%arg0: i32, %arg1: i32, %arg2: i32) -> (i32, i32) {
    %c0_i32 = arith.constant 0 : i32
    return %arg2, %arg1 : i32, i32
  }
  func.func @transform_2(%arg0: i32, %arg1: i32, %arg2: i32) -> (i32, i32) {
    %c0_i32 = arith.constant 0 : i32
    %c0_i32_0 = arith.constant 0 : i32
    return %c0_i32, %arg1 : i32, i32
  }
  func.func @transform_3(%arg0: i32, %arg1: i32, %arg2: i32) -> (i32, i32) {
    %c0_i32 = arith.constant 0 : i32
    return %arg0, %arg1 : i32, i32
  }
}

</mosaic_0001>

<llo_original>
// kernel: forward.1
$region0: #{forward.1}
  #allocation0 [shape = 'u32[]', space=smem, size = 0x4, offset = 0x4, fixed_abs, tag = 'smem constant byte address 0x4 - core index']
  #allocation1 [shape = 'u32[144,128]{1,0:T(1,128)}', space=vmem, size = 0x12000, scoped, tag = 'internal scratch']
  %s0 = inlined_call_operand.hbm [shape: f32[64,1024], index: 0, kind: input, shape index: {}]
  %s1 = inlined_call_operand.hbm [shape: f32[1024,512], index: 1, kind: input, shape index: {}]
  %s2 = inlined_call_operand.hbm [shape: f32[1,512], index: 2, kind: input, shape index: {}]
  %s3 = inlined_call_operand.hbm [shape: f32[64,512], index: 3, kind: output, shape index: {}]
  %s4 = sld [smem:[#allocation0]]
  $region34: #{forward.1} parent=0
    _
  %s6 = ssub.s32 1, %s4
  %s7 = scalar_select 0, %s6, %s4
  $region1: #{forward.1} parent=0
    #allocation2 [shape = 'u8[262144]{0}', space=vmem, size = 0x40000, scoped, tag = 'input window, operand 0, single buffered']
    #allocation3 [shape = 's32[1]{0}', space=sflag, size = 0x4, scoped, tag = 'scoped memory for forward.1']
    #allocation4 [shape = 's32[1]{0}', space=sflag, size = 0x4, scoped, tag = 'scoped memory for forward.1']
    #allocation5 [shape = 'u8[2097152]{0}', space=vmem, size = 0x200000, scoped, tag = 'input window, operand 1, single buffered']
    #allocation6 [shape = 's32[1]{0}', space=sflag, size = 0x4, scoped, tag = 'scoped memory for forward.1']
    #allocation7 [shape = 'u8[2048]{0}', space=vmem, size = 0x800, scoped, tag = 'input window, operand 2, single buffered']
    #allocation8 [shape = 'u8[131072]{0}', space=vmem, size = 0x20000, scoped, tag = 'output window, operand 0, single buffered']
    %8 = vsyncpa [#allocation3], 0
    %9 = vsyncpa [#allocation6], 0
    %10 = vsyncpa [#allocation4], 0
    // Predicated region
    $region2: #{forward.1} parent=1 // pred_check
      _
    $region3: #{forward.1} parent=1 // pred_check_branch
      %12 = sbr.rel (0) target = $region5
    $region4: #{forward.1} parent=1 // pred_region
      %s14 = ssub.s32 8192, 8192
      %15 = vsyncadd [#allocation3], %s14
      %s16 = sshll.u32 [#allocation2], 4
      %s17 = int_to_ptr.vmem [resolvable:$true] %s16
      %22 = dma.hbm_to_vmem [thread:$0]  %s0, 8192, %s17, [#allocation3], 1024, 1024, 64
    $region5: #{forward.1} parent=1 // pred_fallthru
      _
    // Predicated region
    $region6: #{forward.1} parent=1 // pred_check
      _
    $region7: #{forward.1} parent=1 // pred_check_branch
      %24 = sbr.rel (0) target = $region9
    $region8: #{forward.1} parent=1 // pred_region
      %s26 = ssub.s32 65536, 65536
      %27 = vsyncadd [#allocation6], %s26
      %s28 = sshll.u32 [#allocation5], 4
      %s29 = int_to_ptr.vmem [resolvable:$true] %s28
      %34 = dma.hbm_to_vmem [thread:$0]  %s1, 65536, %s29, [#allocation6], 512, 512, 32
    $region9: #{forward.1} parent=1 // pred_fallthru
      _
    // Predicated region
    $region10: #{forward.1} parent=1 // pred_check
      _
    $region11: #{forward.1} parent=1 // pred_check_branch
      %36 = sbr.rel (0) target = $region13
    $region12: #{forward.1} parent=1 // pred_region
      %s38 = ssub.s32 64, 64
      %39 = vsyncadd [#allocation6], %s38
      %s41 = sshll.u32 [#allocation7], 4
      %s42 = int_to_ptr.vmem [resolvable:$true] %s41
      %44 = dma.hbm_to_vmem [thread:$0]  %s2, 64, %s42, [#allocation6]
    $region13: #{forward.1} parent=1 // pred_fallthru
      _
    // Predicated region
    $region14: #{forward.1} parent=1 // pred_check
      _
    $region15: #{forward.1} parent=1 // pred_check_branch
      %46 = sbr.rel (0) target = $region17
    $region16: #{forward.1} parent=1 // pred_region
      %47 = dma.done [#allocation3], 8192
    $region17: #{forward.1} parent=1 // pred_fallthru
      _
    // Predicated region
    $region18: #{forward.1} parent=1 // pred_check
      _
    $region19: #{forward.1} parent=1 // pred_check_branch
      %49 = sbr.rel (0) target = $region21
    $region20: #{forward.1} parent=1 // pred_region
      %50 = dma.done [#allocation6], 65536
    $region21: #{forward.1} parent=1 // pred_fallthru
      _
    // Predicated region
    $region22: #{forward.1} parent=1 // pred_check
      _
    $region23: #{forward.1} parent=1 // pred_check_branch
      %52 = sbr.rel (0) target = $region25
    $region24: #{forward.1} parent=1 // pred_region
      %53 = dma.done [#allocation6], 64
    $region25: #{forward.1} parent=1 // pred_fallthru
      _
    %v54 = vld [vmem:[#allocation2] sm:$0xff]
    %v55 = vld [vmem:[#allocation2 + $0x8] sm:$0xff]
    %v56 = vld [vmem:[#allocation2 + $0x10] sm:$0xff]
    %v57 = vld [vmem:[#allocation2 + $0x18] sm:$0xff]
    %v58 = vld [vmem:[#allocation2 + $0x20] sm:$0xff]
    %v59 = vld [vmem:[#allocation2 + $0x28] sm:$0xff]
    %v60 = vld [vmem:[#allocation2 + $0x30] sm:$0xff]
    %v61 = vld [vmem:[#allocation2 + $0x38] sm:$0xff]
    %v62 = vld [vmem:[#allocation2 + $0x40] sm:$0xff]
    %v63 = vld [vmem:[#allocation2 + $0x48] sm:$0xff]
    %v64 = vld [vmem:[#allocation2 + $0x50] sm:$0xff]
    %v65 = vld [vmem:[#allocation2 + $0x58] sm:$0xff]
    %v66 = vld [vmem:[#allocation2 + $0x60] sm:$0xff]
    %v67 = vld [vmem:[#allocation2 + $0x68] sm:$0xff]
    %v68 = vld [vmem:[#allocation2 + $0x70] sm:$0xff]
    %v69 = vld [vmem:[#allocation2 + $0x78] sm:$0xff]
    %v70 = vld [vmem:[#allocation2 + $0x80] sm:$0xff]
    %v71 = vld [vmem:[#allocation2 + $0x88] sm:$0xff]
    %v72 = vld [vmem:[#allocation2 + $0x90] sm:$0xff]
    %v73 = vld [vmem:[#allocation2 + $0x98] sm:$0xff]
    %v74 = vld [vmem:[#allocation2 + $0xa0] sm:$0xff]
    %v75 = vld [vmem:[#allocation2 + $0xa8] sm:$0xff]
    %v76 = vld [vmem:[#allocation2 + $0xb0] sm:$0xff]
    %v77 = vld [vmem:[#allocation2 + $0xb8] sm:$0xff]
    %v78 = vld [vmem:[#allocation2 + $0xc0] sm:$0xff]
    %v79 = vld [vmem:[#allocation2 + $0xc8] sm:$0xff]
    %v80 = vld [vmem:[#allocation2 + $0xd0] sm:$0xff]
    %v81 = vld [vmem:[#allocation2 + $0xd8] sm:$0xff]
    %v82 = vld [vmem:[#allocation2 + $0xe0] sm:$0xff]
    %v83 = vld [vmem:[#allocation2 + $0xe8] sm:$0xff]
    %v84 = vld [vmem:[#allocation2 + $0xf0] sm:$0xff]
    %v85 = vld [vmem:[#allocation2 + $0xf8] sm:$0xff]
    %v86 = vld [vmem:[#allocation2 + $0x100] sm:$0xff]
    %v87 = vld [vmem:[#allocation2 + $0x108] sm:$0xff]
    %v88 = vld [vmem:[#allocation2 + $0x110] sm:$0xff]
    %v89 = vld [vmem:[#allocation2 + $0x118] sm:$0xff]
    %v90 = vld [vmem:[#allocation2 + $0x120] sm:$0xff]
    %v91 = vld [vmem:[#allocation2 + $0x128] sm:$0xff]
    %v92 = vld [vmem:[#allocation2 + $0x130] sm:$0xff]
    %v93 = vld [vmem:[#allocation2 + $0x138] sm:$0xff]
    %v94 = vld [vmem:[#allocation2 + $0x140] sm:$0xff]
    %v95 = vld [vmem:[#allocation2 + $0x148] sm:$0xff]
    %v96 = vld [vmem:[#allocation2 + $0x150] sm:$0xff]
    %v97 = vld [vmem:[#allocation2 + $0x158] sm:$0xff]
    %v98 = vld [vmem:[#allocation2 + $0x160] sm:$0xff]
    %v99 = vld [vmem:[#allocation2 + $0x168] sm:$0xff]
    %v100 = vld [vmem:[#allocation2 + $0x170] sm:$0xff]
    %v101 = vld [vmem:[#allocation2 + $0x178] sm:$0xff]
    %v102 = vld [vmem:[#allocation2 + $0x180] sm:$0xff]
    %v103 = vld [vmem:[#allocation2 + $0x188] sm:$0xff]
    %v104 = vld [vmem:[#allocation2 + $0x190] sm:$0xff]
    %v105 = vld [vmem:[#allocation2 + $0x198] sm:$0xff]
    %v106 = vld [vmem:[#allocation2 + $0x1a0] sm:$0xff]
    %v107 = vld [vmem:[#allocation2 + $0x1a8] sm:$0xff]
    %v108 = vld [vmem:[#allocation2 + $0x1b0] sm:$0xff]
    %v109 = vld [vmem:[#allocation2 + $0x1b8] sm:$0xff]
    %v110 = vld [vmem:[#allocation2 + $0x1c0] sm:$0xff]
    %v111 = vld [vmem:[#allocation2 + $0x1c8] sm:$0xff]
    %v112 = vld [vmem:[#allocation2 + $0x1d0] sm:$0xff]
    %v113 = vld [vmem:[#allocation2 + $0x1d8] sm:$0xff]
    %v114 = vld [vmem:[#allocation2 + $0x1e0] sm:$0xff]
    %v115 = vld [vmem:[#allocation2 + $0x1e8] sm:$0xff]
    %v116 = vld [vmem:[#allocation2 + $0x1f0] sm:$0xff]
    %v117 = vld [vmem:[#allocation2 + $0x1f8] sm:$0xff]
    %v118 = vld [vmem:[#allocation5] sm:$0xff]
    %v119 = vld [vmem:[#allocation5 + $0x8] sm:$0xff]
    %v120 = vld [vmem:[#allocation5 + $0x10] sm:$0xff]
    %v121 = vld [vmem:[#allocation5 + $0x18] sm:$0xff]
    %v122 = vld [vmem:[#allocation5 + $0x20] sm:$0xff]
    %v123 = vld [vmem:[#allocation5 + $0x28] sm:$0xff]
    %v124 = vld [vmem:[#allocation5 + $0x30] sm:$0xff]
    %v125 = vld [vmem:[#allocation5 + $0x38] sm:$0xff]
    %v126 = vld [vmem:[#allocation5 + $0x40] sm:$0xff]
    %v127 = vld [vmem:[#allocation5 + $0x48] sm:$0xff]
    %v128 = vld [vmem:[#allocation5 + $0x50] sm:$0xff]
    %v129 = vld [vmem:[#allocation5 + $0x58] sm:$0xff]
    %v130 = vld [vmem:[#allocation5 + $0x60] sm:$0xff]
    %v131 = vld [vmem:[#allocation5 + $0x68] sm:$0xff]
    %v132 = vld [vmem:[#allocation5 + $0x70] sm:$0xff]
    %v133 = vld [vmem:[#allocation5 + $0x78] sm:$0xff]
    %v134 = vld [vmem:[#allocation5 + $0x80] sm:$0xff]
    %v135 = vld [vmem:[#allocation5 + $0x88] sm:$0xff]
    %v136 = vld [vmem:[#allocation5 + $0x90] sm:$0xff]
    %v137 = vld [vmem:[#allocation5 + $0x98] sm:$0xff]
    %v138 = vld [vmem:[#allocation5 + $0xa0] sm:$0xff]
    %v139 = vld [vmem:[#allocation5 + $0xa8] sm:$0xff]
    %v140 = vld [vmem:[#allocation5 + $0xb0] sm:$0xff]
    %v141 = vld [vmem:[#allocation5 + $0xb8] sm:$0xff]
    %v142 = vld [vmem:[#allocation5 + $0xc0] sm:$0xff]
    %v143 = vld [vmem:[#allocation5 + $0xc8] sm:$0xff]
    %v144 = vld [vmem:[#allocation5 + $0xd0] sm:$0xff]
    %v145 = vld [vmem:[#allocation5 + $0xd8] sm:$0xff]
    %v146 = vld [vmem:[#allocation5 + $0xe0] sm:$0xff]
    %v147 = vld [vmem:[#allocation5 + $0xe8] sm:$0xff]
    %v148 = vld [vmem:[#allocation5 + $0xf0] sm:$0xff]
    %v149 = vld [vmem:[#allocation5 + $0xf8] sm:$0xff]
    %v150 = vld [vmem:[#allocation5 + $0x100] sm:$0xff]
    %v151 = vld [vmem:[#allocation5 + $0x108] sm:$0xff]
    %v152 = vld [vmem:[#allocation5 + $0x110] sm:$0xff]
    %v153 = vld [vmem:[#allocation5 + $0x118] sm:$0xff]
    %v154 = vld [vmem:[#allocation5 + $0x120] sm:$0xff]
    %v155 = vld [vmem:[#allocation5 + $0x128] sm:$0xff]
    %v156 = vld [vmem:[#allocation5 + $0x130] sm:$0xff]
    %v157 = vld [vmem:[#allocation5 + $0x138] sm:$0xff]
    %v158 = vld [vmem:[#allocation5 + $0x140] sm:$0xff]
    %v159 = vld [vmem:[#allocation5 + $0x148] sm:$0xff]
    %v160 = vld [vmem:[#allocation5 + $0x150] sm:$0xff]
    %v161 = vld [vmem:[#allocation5 + $0x158] sm:$0xff]
    %v162 = vld [vmem:[#allocation5 + $0x160] sm:$0xff]
    %v163 = vld [vmem:[#allocation5 + $0x168] sm:$0xff]
    %v164 = vld [vmem:[#allocation5 + $0x170] sm:$0xff]
    %v165 = vld [vmem:[#allocation5 + $0x178] sm:$0xff]
    %v166 = vld [vmem:[#allocation5 + $0x180] sm:$0xff]
    %v167 = vld [vmem:[#allocation5 + $0x188] sm:$0xff]
    %v168 = vld [vmem:[#allocation5 + $0x190] sm:$0xff]
    %v169 = vld [vmem:[#allocation5 + $0x198] sm:$0xff]
    %v170 = vld [vmem:[#allocation5 + $0x1a0] sm:$0xff]
    %v171 = vld [vmem:[#allocation5 + $0x1a8] sm:$0xff]
    %v172 = vld [vmem:[#allocation5 + $0x1b0] sm:$0xff]
    %v173 = vld [vmem:[#allocation5 + $0x1b8] sm:$0xff]
    %v174 = vld [vmem:[#allocation5 + $0x1c0] sm:$0xff]
    %v175 = vld [vmem:[#allocation5 + $0x1c8] sm:$0xff]
    %v176 = vld [vmem:[#allocation5 + $0x1d0] sm:$0xff]
    %v177 = vld [vmem:[#allocation5 + $0x1d8] sm:$0xff]
    %v178 = vld [vmem:[#allocation5 + $0x1e0] sm:$0xff]
    %v179 = vld [vmem:[#allocation5 + $0x1e8] sm:$0xff]
    %v180 = vld [vmem:[#allocation5 + $0x1f0] sm:$0xff]
    %v181 = vld [vmem:[#allocation5 + $0x1f8] sm:$0xff]
    %v182 = vld [vmem:[#allocation5 + $0x200] sm:$0xff]
    %v183 = vld [vmem:[#allocation5 + $0x208] sm:$0xff]
    %v184 = vld [vmem:[#allocation5 + $0x210] sm:$0xff]
    %v185 = vld [vmem:[#allocation5 + $0x218] sm:$0xff]
    %v186 = vld [vmem:[#allocation5 + $0x220] sm:$0xff]
    %v187 = vld [vmem:[#allocation5 + $0x228] sm:$0xff]
    %v188 = vld [vmem:[#allocation5 + $0x230] sm:$0xff]
    %v189 = vld [vmem:[#allocation5 + $0x238] sm:$0xff]
    %v190 = vld [vmem:[#allocation5 + $0x240] sm:$0xff]
    %v191 = vld [vmem:[#allocation5 + $0x248] sm:$0xff]
    %v192 = vld [vmem:[#allocation5 + $0x250] sm:$0xff]
    %v193 = vld [vmem:[#allocation5 + $0x258] sm:$0xff]
    %v194 = vld [vmem:[#allocation5 + $0x260] sm:$0xff]
    %v195 = vld [vmem:[#allocation5 + $0x268] sm:$0xff]
    %v196 = vld [vmem:[#allocation5 + $0x270] sm:$0xff]
    %v197 = vld [vmem:[#allocation5 + $0x278] sm:$0xff]
    %v198 = vld [vmem:[#allocation5 + $0x280] sm:$0xff]
    %v199 = vld [vmem:[#allocation5 + $0x288] sm:$0xff]
    %v200 = vld [vmem:[#allocation5 + $0x290] sm:$0xff]
    %v201 = vld [vmem:[#allocation5 + $0x298] sm:$0xff]
    %v202 = vld [vmem:[#allocation5 + $0x2a0] sm:$0xff]
    %v203 = vld [vmem:[#allocation5 + $0x2a8] sm:$0xff]
    %v204 = vld [vmem:[#allocation5 + $0x2b0] sm:$0xff]
    %v205 = vld [vmem:[#allocation5 + $0x2b8] sm:$0xff]
    %v206 = vld [vmem:[#allocation5 + $0x2c0] sm:$0xff]
    %v207 = vld [vmem:[#allocation5 + $0x2c8] sm:$0xff]
    %v208 = vld [vmem:[#allocation5 + $0x2d0] sm:$0xff]
    %v209 = vld [vmem:[#allocation5 + $0x2d8] sm:$0xff]
    %v210 = vld [vmem:[#allocation5 + $0x2e0] sm:$0xff]
    %v211 = vld [vmem:[#allocation5 + $0x2e8] sm:$0xff]
    %v212 = vld [vmem:[#allocation5 + $0x2f0] sm:$0xff]
    %v213 = vld [vmem:[#allocation5 + $0x2f8] sm:$0xff]
    %v214 = vld [vmem:[#allocation5 + $0x300] sm:$0xff]
    %v215 = vld [vmem:[#allocation5 + $0x308] sm:$0xff]
    %v216 = vld [vmem:[#allocation5 + $0x310] sm:$0xff]
    %v217 = vld [vmem:[#allocation5 + $0x318] sm:$0xff]
    %v218 = vld [vmem:[#allocation5 + $0x320] sm:$0xff]
    %v219 = vld [vmem:[#allocation5 + $0x328] sm:$0xff]
    %v220 = vld [vmem:[#allocation5 + $0x330] sm:$0xff]
    %v221 = vld [vmem:[#allocation5 + $0x338] sm:$0xff]
    %v222 = vld [vmem:[#allocation5 + $0x340] sm:$0xff]
    %v223 = vld [vmem:[#allocation5 + $0x348] sm:$0xff]
    %v224 = vld [vmem:[#allocation5 + $0x350] sm:$0xff]
    %v225 = vld [vmem:[#allocation5 + $0x358] sm:$0xff]
    %v226 = vld [vmem:[#allocation5 + $0x360] sm:$0xff]
    %v227 = vld [vmem:[#allocation5 + $0x368] sm:$0xff]
    %v228 = vld [vmem:[#allocation5 + $0x370] sm:$0xff]
    %v229 = vld [vmem:[#allocation5 + $0x378] sm:$0xff]
    %v230 = vld [vmem:[#allocation5 + $0x380] sm:$0xff]
    %v231 = vld [vmem:[#allocation5 + $0x388] sm:$0xff]
    %v232 = vld [vmem:[#allocation5 + $0x390] sm:$0xff]
    %v233 = vld [vmem:[#allocation5 + $0x398] sm:$0xff]
    %v234 = vld [vmem:[#allocation5 + $0x3a0] sm:$0xff]
    %v235 = vld [vmem:[#allocation5 + $0x3a8] sm:$0xff]
    %v236 = vld [vmem:[#allocation5 + $0x3b0] sm:$0xff]
    %v237 = vld [vmem:[#allocation5 + $0x3b8] sm:$0xff]
    %v238 = vld [vmem:[#allocation5 + $0x3c0] sm:$0xff]
    %v239 = vld [vmem:[#allocation5 + $0x3c8] sm:$0xff]
    %v240 = vld [vmem:[#allocation5 + $0x3d0] sm:$0xff]
    %v241 = vld [vmem:[#allocation5 + $0x3d8] sm:$0xff]
    %v242 = vld [vmem:[#allocation5 + $0x3e0] sm:$0xff]
    %v243 = vld [vmem:[#allocation5 + $0x3e8] sm:$0xff]
    %v244 = vld [vmem:[#allocation5 + $0x3f0] sm:$0xff]
    %v245 = vld [vmem:[#allocation5 + $0x3f8] sm:$0xff]
    %v246 = vld [vmem:[#allocation5 + $0x400] sm:$0xff]
    %v247 = vld [vmem:[#allocation5 + $0x408] sm:$0xff]
    %v248 = vld [vmem:[#allocation5 + $0x410] sm:$0xff]
    %v249 = vld [vmem:[#allocation5 + $0x418] sm:$0xff]
    %v250 = vld [vmem:[#allocation5 + $0x420] sm:$0xff]
    %v251 = vld [vmem:[#allocation5 + $0x428] sm:$0xff]
    %v252 = vld [vmem:[#allocation5 + $0x430] sm:$0xff]
    %v253 = vld [vmem:[#allocation5 + $0x438] sm:$0xff]
    %v254 = vld [vmem:[#allocation5 + $0x440] sm:$0xff]
    %v255 = vld [vmem:[#allocation5 + $0x448] sm:$0xff]
    %v256 = vld [vmem:[#allocation5 + $0x450] sm:$0xff]
    %v257 = vld [vmem:[#allocation5 + $0x458] sm:$0xff]
    %v258 = vld [vmem:[#allocation5 + $0x460] sm:$0xff]
    %v259 = vld [vmem:[#allocation5 + $0x468] sm:$0xff]
    %v260 = vld [vmem:[#allocation5 + $0x470] sm:$0xff]
    %v261 = vld [vmem:[#allocation5 + $0x478] sm:$0xff]
    %v262 = vld [vmem:[#allocation5 + $0x480] sm:$0xff]
    %v263 = vld [vmem:[#allocation5 + $0x488] sm:$0xff]
    %v264 = vld [vmem:[#allocation5 + $0x490] sm:$0xff]
    %v265 = vld [vmem:[#allocation5 + $0x498] sm:$0xff]
    %v266 = vld [vmem:[#allocation5 + $0x4a0] sm:$0xff]
    %v267 = vld [vmem:[#allocation5 + $0x4a8] sm:$0xff]
    %v268 = vld [vmem:[#allocation5 + $0x4b0] sm:$0xff]
    %v269 = vld [vmem:[#allocation5 + $0x4b8] sm:$0xff]
    %v270 = vld [vmem:[#allocation5 + $0x4c0] sm:$0xff]
    %v271 = vld [vmem:[#allocation5 + $0x4c8] sm:$0xff]
    %v272 = vld [vmem:[#allocation5 + $0x4d0] sm:$0xff]
    %v273 = vld [vmem:[#allocation5 + $0x4d8] sm:$0xff]
    %v274 = vld [vmem:[#allocation5 + $0x4e0] sm:$0xff]
    %v275 = vld [vmem:[#allocation5 + $0x4e8] sm:$0xff]
    %v276 = vld [vmem:[#allocation5 + $0x4f0] sm:$0xff]
    %v277 = vld [vmem:[#allocation5 + $0x4f8] sm:$0xff]
    %v278 = vld [vmem:[#allocation5 + $0x500] sm:$0xff]
    %v279 = vld [vmem:[#allocation5 + $0x508] sm:$0xff]
    %v280 = vld [vmem:[#allocation5 + $0x510] sm:$0xff]
    %v281 = vld [vmem:[#allocation5 + $0x518] sm:$0xff]
    %v282 = vld [vmem:[#allocation5 + $0x520] sm:$0xff]
    %v283 = vld [vmem:[#allocation5 + $0x528] sm:$0xff]
    %v284 = vld [vmem:[#allocation5 + $0x530] sm:$0xff]
    %v285 = vld [vmem:[#allocation5 + $0x538] sm:$0xff]
    %v286 = vld [vmem:[#allocation5 + $0x540] sm:$0xff]
    %v287 = vld [vmem:[#allocation5 + $0x548] sm:$0xff]
    %v288 = vld [vmem:[#allocation5 + $0x550] sm:$0xff]
    %v289 = vld [vmem:[#allocation5 + $0x558] sm:$0xff]
    %v290 = vld [vmem:[#allocation5 + $0x560] sm:$0xff]
    %v291 = vld [vmem:[#allocation5 + $0x568] sm:$0xff]
    %v292 = vld [vmem:[#allocation5 + $0x570] sm:$0xff]
    %v293 = vld [vmem:[#allocation5 + $0x578] sm:$0xff]
    %v294 = vld [vmem:[#allocation5 + $0x580] sm:$0xff]
    %v295 = vld [vmem:[#allocation5 + $0x588] sm:$0xff]
    %v296 = vld [vmem:[#allocation5 + $0x590] sm:$0xff]
    %v297 = vld [vmem:[#allocation5 + $0x598] sm:$0xff]
    %v298 = vld [vmem:[#allocation5 + $0x5a0] sm:$0xff]
    %v299 = vld [vmem:[#allocation5 + $0x5a8] sm:$0xff]
    %v300 = vld [vmem:[#allocation5 + $0x5b0] sm:$0xff]
    %v301 = vld [vmem:[#allocation5 + $0x5b8] sm:$0xff]
    %v302 = vld [vmem:[#allocation5 + $0x5c0] sm:$0xff]
    %v303 = vld [vmem:[#allocation5 + $0x5c8] sm:$0xff]
    %v304 = vld [vmem:[#allocation5 + $0x5d0] sm:$0xff]
    %v305 = vld [vmem:[#allocation5 + $0x5d8] sm:$0xff]
    %v306 = vld [vmem:[#allocation5 + $0x5e0] sm:$0xff]
    %v307 = vld [vmem:[#allocation5 + $0x5e8] sm:$0xff]
    %v308 = vld [vmem:[#allocation5 + $0x5f0] sm:$0xff]
    %v309 = vld [vmem:[#allocation5 + $0x5f8] sm:$0xff]
    %v310 = vld [vmem:[#allocation5 + $0x600] sm:$0xff]
    %v311 = vld [vmem:[#allocation5 + $0x608] sm:$0xff]
    %v312 = vld [vmem:[#allocation5 + $0x610] sm:$0xff]
    %v313 = vld [vmem:[#allocation5 + $0x618] sm:$0xff]
    %v314 = vld [vmem:[#allocation5 + $0x620] sm:$0xff]
    %v315 = vld [vmem:[#allocation5 + $0x628] sm:$0xff]
    %v316 = vld [vmem:[#allocation5 + $0x630] sm:$0xff]
    %v317 = vld [vmem:[#allocation5 + $0x638] sm:$0xff]
    %v318 = vld [vmem:[#allocation5 + $0x640] sm:$0xff]
    %v319 = vld [vmem:[#allocation5 + $0x648] sm:$0xff]
    %v320 = vld [vmem:[#allocation5 + $0x650] sm:$0xff]
    %v321 = vld [vmem:[#allocation5 + $0x658] sm:$0xff]
    %v322 = vld [vmem:[#allocation5 + $0x660] sm:$0xff]
    %v323 = vld [vmem:[#allocation5 + $0x668] sm:$0xff]
    %v324 = vld [vmem:[#allocation5 + $0x670] sm:$0xff]
    %v325 = vld [vmem:[#allocation5 + $0x678] sm:$0xff]
    %v326 = vld [vmem:[#allocation5 + $0x680] sm:$0xff]
    %v327 = vld [vmem:[#allocation5 + $0x688] sm:$0xff]
    %v328 = vld [vmem:[#allocation5 + $0x690] sm:$0xff]
    %v329 = vld [vmem:[#allocation5 + $0x698] sm:$0xff]
    %v330 = vld [vmem:[#allocation5 + $0x6a0] sm:$0xff]
    %v331 = vld [vmem:[#allocation5 + $0x6a8] sm:$0xff]
    %v332 = vld [vmem:[#allocation5 + $0x6b0] sm:$0xff]
    %v333 = vld [vmem:[#allocation5 + $0x6b8] sm:$0xff]
    %v334 = vld [vmem:[#allocation5 + $0x6c0] sm:$0xff]
    %v335 = vld [vmem:[#allocation5 + $0x6c8] sm:$0xff]
    %v336 = vld [vmem:[#allocation5 + $0x6d0] sm:$0xff]
    %v337 = vld [vmem:[#allocation5 + $0x6d8] sm:$0xff]
    %v338 = vld [vmem:[#allocation5 + $0x6e0] sm:$0xff]
    %v339 = vld [vmem:[#allocation5 + $0x6e8] sm:$0xff]
    %v340 = vld [vmem:[#allocation5 + $0x6f0] sm:$0xff]
    %v341 = vld [vmem:[#allocation5 + $0x6f8] sm:$0xff]
    %v342 = vld [vmem:[#allocation5 + $0x700] sm:$0xff]
    %v343 = vld [vmem:[#allocation5 + $0x708] sm:$0xff]
    %v344 = vld [vmem:[#allocation5 + $0x710] sm:$0xff]
    %v345 = vld [vmem:[#allocation5 + $0x718] sm:$0xff]
    %v346 = vld [vmem:[#allocation5 + $0x720] sm:$0xff]
    %v347 = vld [vmem:[#allocation5 + $0x728] sm:$0xff]
    %v348 = vld [vmem:[#allocation5 + $0x730] sm:$0xff]
    %v349 = vld [vmem:[#allocation5 + $0x738] sm:$0xff]
    %v350 = vld [vmem:[#allocation5 + $0x740] sm:$0xff]
    %v351 = vld [vmem:[#allocation5 + $0x748] sm:$0xff]
    %v352 = vld [vmem:[#allocation5 + $0x750] sm:$0xff]
    %v353 = vld [vmem:[#allocation5 + $0x758] sm:$0xff]
    %v354 = vld [vmem:[#allocation5 + $0x760] sm:$0xff]
    %v355 = vld [vmem:[#allocation5 + $0x768] sm:$0xff]
    %v356 = vld [vmem:[#allocation5 + $0x770] sm:$0xff]
    %v357 = vld [vmem:[#allocation5 + $0x778] sm:$0xff]
    %v358 = vld [vmem:[#allocation5 + $0x780] sm:$0xff]
    %v359 = vld [vmem:[#allocation5 + $0x788] sm:$0xff]
    %v360 = vld [vmem:[#allocation5 + $0x790] sm:$0xff]
    %v361 = vld [vmem:[#allocation5 + $0x798] sm:$0xff]
    %v362 = vld [vmem:[#allocation5 + $0x7a0] sm:$0xff]
    %v363 = vld [vmem:[#allocation5 + $0x7a8] sm:$0xff]
    %v364 = vld [vmem:[#allocation5 + $0x7b0] sm:$0xff]
    %v365 = vld [vmem:[#allocation5 + $0x7b8] sm:$0xff]
    %v366 = vld [vmem:[#allocation5 + $0x7c0] sm:$0xff]
    %v367 = vld [vmem:[#allocation5 + $0x7c8] sm:$0xff]
    %v368 = vld [vmem:[#allocation5 + $0x7d0] sm:$0xff]
    %v369 = vld [vmem:[#allocation5 + $0x7d8] sm:$0xff]
    %v370 = vld [vmem:[#allocation5 + $0x7e0] sm:$0xff]
    %v371 = vld [vmem:[#allocation5 + $0x7e8] sm:$0xff]
    %v372 = vld [vmem:[#allocation5 + $0x7f0] sm:$0xff]
    %v373 = vld [vmem:[#allocation5 + $0x7f8] sm:$0xff]
    %v374 = vld [vmem:[#allocation5 + $0x800] sm:$0xff]
    %v375 = vld [vmem:[#allocation5 + $0x808] sm:$0xff]
    %v376 = vld [vmem:[#allocation5 + $0x810] sm:$0xff]
    %v377 = vld [vmem:[#allocation5 + $0x818] sm:$0xff]
    %v378 = vld [vmem:[#allocation5 + $0x820] sm:$0xff]
    %v379 = vld [vmem:[#allocation5 + $0x828] sm:$0xff]
    %v380 = vld [vmem:[#allocation5 + $0x830] sm:$0xff]
    %v381 = vld [vmem:[#allocation5 + $0x838] sm:$0xff]
    %v382 = vld [vmem:[#allocation5 + $0x840] sm:$0xff]
    %v383 = vld [vmem:[#allocation5 + $0x848] sm:$0xff]
    %v384 = vld [vmem:[#allocation5 + $0x850] sm:$0xff]
    %v385 = vld [vmem:[#allocation5 + $0x858] sm:$0xff]
    %v386 = vld [vmem:[#allocation5 + $0x860] sm:$0xff]
    %v387 = vld [vmem:[#allocation5 + $0x868] sm:$0xff]
    %v388 = vld [vmem:[#allocation5 + $0x870] sm:$0xff]
    %v389 = vld [vmem:[#allocation5 + $0x878] sm:$0xff]
    %v390 = vld [vmem:[#allocation5 + $0x880] sm:$0xff]
    %v391 = vld [vmem:[#allocation5 + $0x888] sm:$0xff]
    %v392 = vld [vmem:[#allocation5 + $0x890] sm:$0xff]
    %v393 = vld [vmem:[#allocation5 + $0x898] sm:$0xff]
    %v394 = vld [vmem:[#allocation5 + $0x8a0] sm:$0xff]
    %v395 = vld [vmem:[#allocation5 + $0x8a8] sm:$0xff]
    %v396 = vld [vmem:[#allocation5 + $0x8b0] sm:$0xff]
    %v397 = vld [vmem:[#allocation5 + $0x8b8] sm:$0xff]
    %v398 = vld [vmem:[#allocation5 + $0x8c0] sm:$0xff]
    %v399 = vld [vmem:[#allocation5 + $0x8c8] sm:$0xff]
    %v400 = vld [vmem:[#allocation5 + $0x8d0] sm:$0xff]
    %v401 = vld [vmem:[#allocation5 + $0x8d8] sm:$0xff]
    %v402 = vld [vmem:[#allocation5 + $0x8e0] sm:$0xff]
    %v403 = vld [vmem:[#allocation5 + $0x8e8] sm:$0xff]
    %v404 = vld [vmem:[#allocation5 + $0x8f0] sm:$0xff]
    %v405 = vld [vmem:[#allocation5 + $0x8f8] sm:$0xff]
    %v406 = vld [vmem:[#allocation5 + $0x900] sm:$0xff]
    %v407 = vld [vmem:[#allocation5 + $0x908] sm:$0xff]
    %v408 = vld [vmem:[#allocation5 + $0x910] sm:$0xff]
    %v409 = vld [vmem:[#allocation5 + $0x918] sm:$0xff]
    %v410 = vld [vmem:[#allocation5 + $0x920] sm:$0xff]
    %v411 = vld [vmem:[#allocation5 + $0x928] sm:$0xff]
    %v412 = vld [vmem:[#allocation5 + $0x930] sm:$0xff]
    %v413 = vld [vmem:[#allocation5 + $0x938] sm:$0xff]
    %v414 = vld [vmem:[#allocation5 + $0x940] sm:$0xff]
    %v415 = vld [vmem:[#allocation5 + $0x948] sm:$0xff]
    %v416 = vld [vmem:[#allocation5 + $0x950] sm:$0xff]
    %v417 = vld [vmem:[#allocation5 + $0x958] sm:$0xff]
    %v418 = vld [vmem:[#allocation5 + $0x960] sm:$0xff]
    %v419 = vld [vmem:[#allocation5 + $0x968] sm:$0xff]
    %v420 = vld [vmem:[#allocation5 + $0x970] sm:$0xff]
    %v421 = vld [vmem:[#allocation5 + $0x978] sm:$0xff]
    %v422 = vld [vmem:[#allocation5 + $0x980] sm:$0xff]
    %v423 = vld [vmem:[#allocation5 + $0x988] sm:$0xff]
    %v424 = vld [vmem:[#allocation5 + $0x990] sm:$0xff]
    %v425 = vld [vmem:[#allocation5 + $0x998] sm:$0xff]
    %v426 = vld [vmem:[#allocation5 + $0x9a0] sm:$0xff]
    %v427 = vld [vmem:[#allocation5 + $0x9a8] sm:$0xff]
    %v428 = vld [vmem:[#allocation5 + $0x9b0] sm:$0xff]
    %v429 = vld [vmem:[#allocation5 + $0x9b8] sm:$0xff]
    %v430 = vld [vmem:[#allocation5 + $0x9c0] sm:$0xff]
    %v431 = vld [vmem:[#allocation5 + $0x9c8] sm:$0xff]
    %v432 = vld [vmem:[#allocation5 + $0x9d0] sm:$0xff]
    %v433 = vld [vmem:[#allocation5 + $0x9d8] sm:$0xff]
    %v434 = vld [vmem:[#allocation5 + $0x9e0] sm:$0xff]
    %v435 = vld [vmem:[#allocation5 + $0x9e8] sm:$0xff]
    %v436 = vld [vmem:[#allocation5 + $0x9f0] sm:$0xff]
    %v437 = vld [vmem:[#allocation5 + $0x9f8] sm:$0xff]
    %v438 = vld [vmem:[#allocation5 + $0xa00] sm:$0xff]
    %v439 = vld [vmem:[#allocation5 + $0xa08] sm:$0xff]
    %v440 = vld [vmem:[#allocation5 + $0xa10] sm:$0xff]
    %v441 = vld [vmem:[#allocation5 + $0xa18] sm:$0xff]
    %v442 = vld [vmem:[#allocation5 + $0xa20] sm:$0xff]
    %v443 = vld [vmem:[#allocation5 + $0xa28] sm:$0xff]
    %v444 = vld [vmem:[#allocation5 + $0xa30] sm:$0xff]
    %v445 = vld [vmem:[#allocation5 + $0xa38] sm:$0xff]
    %v446 = vld [vmem:[#allocation5 + $0xa40] sm:$0xff]
    %v447 = vld [vmem:[#allocation5 + $0xa48] sm:$0xff]
    %v448 = vld [vmem:[#allocation5 + $0xa50] sm:$0xff]
    %v449 = vld [vmem:[#allocation5 + $0xa58] sm:$0xff]
    %v450 = vld [vmem:[#allocation5 + $0xa60] sm:$0xff]
    %v451 = vld [vmem:[#allocation5 + $0xa68] sm:$0xff]
    %v452 = vld [vmem:[#allocation5 + $0xa70] sm:$0xff]
    %v453 = vld [vmem:[#allocation5 + $0xa78] sm:$0xff]
    %v454 = vld [vmem:[#allocation5 + $0xa80] sm:$0xff]
    %v455 = vld [vmem:[#allocation5 + $0xa88] sm:$0xff]
    %v456 = vld [vmem:[#allocation5 + $0xa90] sm:$0xff]
    %v457 = vld [vmem:[#allocation5 + $0xa98] sm:$0xff]
    %v458 = vld [vmem:[#allocation5 + $0xaa0] sm:$0xff]
    %v459 = vld [vmem:[#allocation5 + $0xaa8] sm:$0xff]
    %v460 = vld [vmem:[#allocation5 + $0xab0] sm:$0xff]
    %v461 = vld [vmem:[#allocation5 + $0xab8] sm:$0xff]
    %v462 = vld [vmem:[#allocation5 + $0xac0] sm:$0xff]
    %v463 = vld [vmem:[#allocation5 + $0xac8] sm:$0xff]
    %v464 = vld [vmem:[#allocation5 + $0xad0] sm:$0xff]
    %v465 = vld [vmem:[#allocation5 + $0xad8] sm:$0xff]
    %v466 = vld [vmem:[#allocation5 + $0xae0] sm:$0xff]
    %v467 = vld [vmem:[#allocation5 + $0xae8] sm:$0xff]
    %v468 = vld [vmem:[#allocation5 + $0xaf0] sm:$0xff]
    %v469 = vld [vmem:[#allocation5 + $0xaf8] sm:$0xff]
    %v470 = vld [vmem:[#allocation5 + $0xb00] sm:$0xff]
    %v471 = vld [vmem:[#allocation5 + $0xb08] sm:$0xff]
    %v472 = vld [vmem:[#allocation5 + $0xb10] sm:$0xff]
    %v473 = vld [vmem:[#allocation5 + $0xb18] sm:$0xff]
    %v474 = vld [vmem:[#allocation5 + $0xb20] sm:$0xff]
    %v475 = vld [vmem:[#allocation5 + $0xb28] sm:$0xff]
    %v476 = vld [vmem:[#allocation5 + $0xb30] sm:$0xff]
    %v477 = vld [vmem:[#allocation5 + $0xb38] sm:$0xff]
    %v478 = vld [vmem:[#allocation5 + $0xb40] sm:$0xff]
    %v479 = vld [vmem:[#allocation5 + $0xb48] sm:$0xff]
    %v480 = vld [vmem:[#allocation5 + $0xb50] sm:$0xff]
    %v481 = vld [vmem:[#allocation5 + $0xb58] sm:$0xff]
    %v482 = vld [vmem:[#allocation5 + $0xb60] sm:$0xff]
    %v483 = vld [vmem:[#allocation5 + $0xb68] sm:$0xff]
    %v484 = vld [vmem:[#allocation5 + $0xb70] sm:$0xff]
    %v485 = vld [vmem:[#allocation5 + $0xb78] sm:$0xff]
    %v486 = vld [vmem:[#allocation5 + $0xb80] sm:$0xff]
    %v487 = vld [vmem:[#allocation5 + $0xb88] sm:$0xff]
    %v488 = vld [vmem:[#allocation5 + $0xb90] sm:$0xff]
    %v489 = vld [vmem:[#allocation5 + $0xb98] sm:$0xff]
    %v490 = vld [vmem:[#allocation5 + $0xba0] sm:$0xff]
    %v491 = vld [vmem:[#allocation5 + $0xba8] sm:$0xff]
    %v492 = vld [vmem:[#allocation5 + $0xbb0] sm:$0xff]
    %v493 = vld [vmem:[#allocation5 + $0xbb8] sm:$0xff]
    %v494 = vld [vmem:[#allocation5 + $0xbc0] sm:$0xff]
    %v495 = vld [vmem:[#allocation5 + $0xbc8] sm:$0xff]
    %v496 = vld [vmem:[#allocation5 + $0xbd0] sm:$0xff]
    %v497 = vld [vmem:[#allocation5 + $0xbd8] sm:$0xff]
    %v498 = vld [vmem:[#allocation5 + $0xbe0] sm:$0xff]
    %v499 = vld [vmem:[#allocation5 + $0xbe8] sm:$0xff]
    %v500 = vld [vmem:[#allocation5 + $0xbf0] sm:$0xff]
    %v501 = vld [vmem:[#allocation5 + $0xbf8] sm:$0xff]
    %v502 = vld [vmem:[#allocation5 + $0xc00] sm:$0xff]
    %v503 = vld [vmem:[#allocation5 + $0xc08] sm:$0xff]
    %v504 = vld [vmem:[#allocation5 + $0xc10] sm:$0xff]
    %v505 = vld [vmem:[#allocation5 + $0xc18] sm:$0xff]
    %v506 = vld [vmem:[#allocation5 + $0xc20] sm:$0xff]
    %v507 = vld [vmem:[#allocation5 + $0xc28] sm:$0xff]
    %v508 = vld [vmem:[#allocation5 + $0xc30] sm:$0xff]
    %v509 = vld [vmem:[#allocation5 + $0xc38] sm:$0xff]
    %v510 = vld [vmem:[#allocation5 + $0xc40] sm:$0xff]
    %v511 = vld [vmem:[#allocation5 + $0xc48] sm:$0xff]
    %v512 = vld [vmem:[#allocation5 + $0xc50] sm:$0xff]
    %v513 = vld [vmem:[#allocation5 + $0xc58] sm:$0xff]
    %v514 = vld [vmem:[#allocation5 + $0xc60] sm:$0xff]
    %v515 = vld [vmem:[#allocation5 + $0xc68] sm:$0xff]
    %v516 = vld [vmem:[#allocation5 + $0xc70] sm:$0xff]
    %v517 = vld [vmem:[#allocation5 + $0xc78] sm:$0xff]
    %v518 = vld [vmem:[#allocation5 + $0xc80] sm:$0xff]
    %v519 = vld [vmem:[#allocation5 + $0xc88] sm:$0xff]
    %v520 = vld [vmem:[#allocation5 + $0xc90] sm:$0xff]
    %v521 = vld [vmem:[#allocation5 + $0xc98] sm:$0xff]
    %v522 = vld [vmem:[#allocation5 + $0xca0] sm:$0xff]
    %v523 = vld [vmem:[#allocation5 + $0xca8] sm:$0xff]
    %v524 = vld [vmem:[#allocation5 + $0xcb0] sm:$0xff]
    %v525 = vld [vmem:[#allocation5 + $0xcb8] sm:$0xff]
    %v526 = vld [vmem:[#allocation5 + $0xcc0] sm:$0xff]
    %v527 = vld [vmem:[#allocation5 + $0xcc8] sm:$0xff]
    %v528 = vld [vmem:[#allocation5 + $0xcd0] sm:$0xff]
    %v529 = vld [vmem:[#allocation5 + $0xcd8] sm:$0xff]
    %v530 = vld [vmem:[#allocation5 + $0xce0] sm:$0xff]
    %v531 = vld [vmem:[#allocation5 + $0xce8] sm:$0xff]
    %v532 = vld [vmem:[#allocation5 + $0xcf0] sm:$0xff]
    %v533 = vld [vmem:[#allocation5 + $0xcf8] sm:$0xff]
    %v534 = vld [vmem:[#allocation5 + $0xd00] sm:$0xff]
    %v535 = vld [vmem:[#allocation5 + $0xd08] sm:$0xff]
    %v536 = vld [vmem:[#allocation5 + $0xd10] sm:$0xff]
    %v537 = vld [vmem:[#allocation5 + $0xd18] sm:$0xff]
    %v538 = vld [vmem:[#allocation5 + $0xd20] sm:$0xff]
    %v539 = vld [vmem:[#allocation5 + $0xd28] sm:$0xff]
    %v540 = vld [vmem:[#allocation5 + $0xd30] sm:$0xff]
    %v541 = vld [vmem:[#allocation5 + $0xd38] sm:$0xff]
    %v542 = vld [vmem:[#allocation5 + $0xd40] sm:$0xff]
    %v543 = vld [vmem:[#allocation5 + $0xd48] sm:$0xff]
    %v544 = vld [vmem:[#allocation5 + $0xd50] sm:$0xff]
    %v545 = vld [vmem:[#allocation5 + $0xd58] sm:$0xff]
    %v546 = vld [vmem:[#allocation5 + $0xd60] sm:$0xff]
    %v547 = vld [vmem:[#allocation5 + $0xd68] sm:$0xff]
    %v548 = vld [vmem:[#allocation5 + $0xd70] sm:$0xff]
    %v549 = vld [vmem:[#allocation5 + $0xd78] sm:$0xff]
    %v550 = vld [vmem:[#allocation5 + $0xd80] sm:$0xff]
    %v551 = vld [vmem:[#allocation5 + $0xd88] sm:$0xff]
    %v552 = vld [vmem:[#allocation5 + $0xd90] sm:$0xff]
    %v553 = vld [vmem:[#allocation5 + $0xd98] sm:$0xff]
    %v554 = vld [vmem:[#allocation5 + $0xda0] sm:$0xff]
    %v555 = vld [vmem:[#allocation5 + $0xda8] sm:$0xff]
    %v556 = vld [vmem:[#allocation5 + $0xdb0] sm:$0xff]
    %v557 = vld [vmem:[#allocation5 + $0xdb8] sm:$0xff]
    %v558 = vld [vmem:[#allocation5 + $0xdc0] sm:$0xff]
    %v559 = vld [vmem:[#allocation5 + $0xdc8] sm:$0xff]
    %v560 = vld [vmem:[#allocation5 + $0xdd0] sm:$0xff]
    %v561 = vld [vmem:[#allocation5 + $0xdd8] sm:$0xff]
    %v562 = vld [vmem:[#allocation5 + $0xde0] sm:$0xff]
    %v563 = vld [vmem:[#allocation5 + $0xde8] sm:$0xff]
    %v564 = vld [vmem:[#allocation5 + $0xdf0] sm:$0xff]
    %v565 = vld [vmem:[#allocation5 + $0xdf8] sm:$0xff]
    %v566 = vld [vmem:[#allocation5 + $0xe00] sm:$0xff]
    %v567 = vld [vmem:[#allocation5 + $0xe08] sm:$0xff]
    %v568 = vld [vmem:[#allocation5 + $0xe10] sm:$0xff]
    %v569 = vld [vmem:[#allocation5 + $0xe18] sm:$0xff]
    %v570 = vld [vmem:[#allocation5 + $0xe20] sm:$0xff]
    %v571 = vld [vmem:[#allocation5 + $0xe28] sm:$0xff]
    %v572 = vld [vmem:[#allocation5 + $0xe30] sm:$0xff]
    %v573 = vld [vmem:[#allocation5 + $0xe38] sm:$0xff]
    %v574 = vld [vmem:[#allocation5 + $0xe40] sm:$0xff]
    %v575 = vld [vmem:[#allocation5 + $0xe48] sm:$0xff]
    %v576 = vld [vmem:[#allocation5 + $0xe50] sm:$0xff]
    %v577 = vld [vmem:[#allocation5 + $0xe58] sm:$0xff]
    %v578 = vld [vmem:[#allocation5 + $0xe60] sm:$0xff]
    %v579 = vld [vmem:[#allocation5 + $0xe68] sm:$0xff]
    %v580 = vld [vmem:[#allocation5 + $0xe70] sm:$0xff]
    %v581 = vld [vmem:[#allocation5 + $0xe78] sm:$0xff]
    %v582 = vld [vmem:[#allocation5 + $0xe80] sm:$0xff]
    %v583 = vld [vmem:[#allocation5 + $0xe88] sm:$0xff]
    %v584 = vld [vmem:[#allocation5 + $0xe90] sm:$0xff]
    %v585 = vld [vmem:[#allocation5 + $0xe98] sm:$0xff]
    %v586 = vld [vmem:[#allocation5 + $0xea0] sm:$0xff]
    %v587 = vld [vmem:[#allocation5 + $0xea8] sm:$0xff]
    %v588 = vld [vmem:[#allocation5 + $0xeb0] sm:$0xff]
    %v589 = vld [vmem:[#allocation5 + $0xeb8] sm:$0xff]
    %v590 = vld [vmem:[#allocation5 + $0xec0] sm:$0xff]
    %v591 = vld [vmem:[#allocation5 + $0xec8] sm:$0xff]
    %v592 = vld [vmem:[#allocation5 + $0xed0] sm:$0xff]
    %v593 = vld [vmem:[#allocation5 + $0xed8] sm:$0xff]
    %v594 = vld [vmem:[#allocation5 + $0xee0] sm:$0xff]
    %v595 = vld [vmem:[#allocation5 + $0xee8] sm:$0xff]
    %v596 = vld [vmem:[#allocation5 + $0xef0] sm:$0xff]
    %v597 = vld [vmem:[#allocation5 + $0xef8] sm:$0xff]
    %v598 = vld [vmem:[#allocation5 + $0xf00] sm:$0xff]
    %v599 = vld [vmem:[#allocation5 + $0xf08] sm:$0xff]
    %v600 = vld [vmem:[#allocation5 + $0xf10] sm:$0xff]
    %v601 = vld [vmem:[#allocation5 + $0xf18] sm:$0xff]
    %v602 = vld [vmem:[#allocation5 + $0xf20] sm:$0xff]
    %v603 = vld [vmem:[#allocation5 + $0xf28] sm:$0xff]
    %v604 = vld [vmem:[#allocation5 + $0xf30] sm:$0xff]
    %v605 = vld [vmem:[#allocation5 + $0xf38] sm:$0xff]
    %v606 = vld [vmem:[#allocation5 + $0xf40] sm:$0xff]
    %v607 = vld [vmem:[#allocation5 + $0xf48] sm:$0xff]
    %v608 = vld [vmem:[#allocation5 + $0xf50] sm:$0xff]
    %v609 = vld [vmem:[#allocation5 + $0xf58] sm:$0xff]
    %v610 = vld [vmem:[#allocation5 + $0xf60] sm:$0xff]
    %v611 = vld [vmem:[#allocation5 + $0xf68] sm:$0xff]
    %v612 = vld [vmem:[#allocation5 + $0xf70] sm:$0xff]
    %v613 = vld [vmem:[#allocation5 + $0xf78] sm:$0xff]
    %v614 = vld [vmem:[#allocation5 + $0xf80] sm:$0xff]
    %v615 = vld [vmem:[#allocation5 + $0xf88] sm:$0xff]
    %v616 = vld [vmem:[#allocation5 + $0xf90] sm:$0xff]
    %v617 = vld [vmem:[#allocation5 + $0xf98] sm:$0xff]
    %v618 = vld [vmem:[#allocation5 + $0xfa0] sm:$0xff]
    %v619 = vld [vmem:[#allocation5 + $0xfa8] sm:$0xff]
    %v620 = vld [vmem:[#allocation5 + $0xfb0] sm:$0xff]
    %v621 = vld [vmem:[#allocation5 + $0xfb8] sm:$0xff]
    %v622 = vld [vmem:[#allocation5 + $0xfc0] sm:$0xff]
    %v623 = vld [vmem:[#allocation5 + $0xfc8] sm:$0xff]
    %v624 = vld [vmem:[#allocation5 + $0xfd0] sm:$0xff]
    %v625 = vld [vmem:[#allocation5 + $0xfd8] sm:$0xff]
    %v626 = vld [vmem:[#allocation5 + $0xfe0] sm:$0xff]
    %v627 = vld [vmem:[#allocation5 + $0xfe8] sm:$0xff]
    %v628 = vld [vmem:[#allocation5 + $0xff0] sm:$0xff]
    %v629 = vld [vmem:[#allocation5 + $0xff8] sm:$0xff]
    %v630 = vld [vmem:[#allocation7] sm:$0xf]
    %v632 = vlaneseq
    %v633 = vshrl.u32 %v632, 7
    %v634 = vsub.s32 0, %v633
    %v635 = vrot.slane %v630, %v634
    %v636 = vlaneseq
    %v637 = vshrl.u32 %v636, 7
    %v638 = vsub.s32 1, %v637
    %v639 = vrot.slane %v630, %v638
    %v640 = vlaneseq
    %v641 = vshrl.u32 %v640, 7
    %v642 = vsub.s32 2, %v641
    %v643 = vrot.slane %v630, %v642
    %v644 = vlaneseq
    %v645 = vshrl.u32 %v644, 7
    %v646 = vsub.s32 3, %v645
    %v647 = vrot.slane %v630, %v646
    %652 = vmatprep.subr.mxu0 %v119
    %653 = vmatpush1.msra.mxu0 %v118
    %654 = vmatprep.subr.mxu0 %v123
    %655 = vmatpush1.msra.mxu0 %v122
    %656 = vmatprep.subr.mxu0 %v127
    %657 = vmatpush1.msra.mxu0 %v126
    %658 = vmatprep.subr.mxu0 %v131
    %659 = vmatpush1.msra.mxu0 %v130
    %660 = vmatprep.subr.mxu0 %v135
    %661 = vmatpush1.msra.mxu0 %v134
    %662 = vmatprep.subr.mxu0 %v139
    %663 = vmatpush1.msra.mxu0 %v138
    %664 = vmatprep.subr.mxu0 %v143
    %665 = vmatpush1.msra.mxu0 %v142
    %666 = vmatprep.subr.mxu0 %v147
    %667 = vmatpush1.msra.mxu0 %v146
    %668 = vmatprep.subr.mxu0 %v151
    %669 = vmatpush1.msra.mxu0 %v150
    %670 = vmatprep.subr.mxu0 %v155
    %671 = vmatpush1.msra.mxu0 %v154
    %672 = vmatprep.subr.mxu0 %v159
    %673 = vmatpush1.msra.mxu0 %v158
    %674 = vmatprep.subr.mxu0 %v163
    %675 = vmatpush1.msra.mxu0 %v162
    %676 = vmatprep.subr.mxu0 %v167
    %677 = vmatpush1.msra.mxu0 %v166
    %678 = vmatprep.subr.mxu0 %v171
    %679 = vmatpush1.msra.mxu0 %v170
    %680 = vmatprep.subr.mxu0 %v175
    %681 = vmatpush1.msra.mxu0 %v174
    %682 = vmatprep.subr.mxu0 %v179
    %683 = vmatpush1.msra.mxu0 %v178
    %684 = vmatprep.subr.mxu0 %v183
    %685 = vmatpush1.msra.mxu0 %v182
    %686 = vmatprep.subr.mxu0 %v187
    %687 = vmatpush1.msra.mxu0 %v186
    %688 = vmatprep.subr.mxu0 %v191
    %689 = vmatpush1.msra.mxu0 %v190
    %690 = vmatprep.subr.mxu0 %v195
    %691 = vmatpush1.msra.mxu0 %v194
    %692 = vmatprep.subr.mxu0 %v199
    %693 = vmatpush1.msra.mxu0 %v198
    %694 = vmatprep.subr.mxu0 %v203
    %695 = vmatpush1.msra.mxu0 %v202
    %696 = vmatprep.subr.mxu0 %v207
    %697 = vmatpush1.msra.mxu0 %v206
    %698 = vmatprep.subr.mxu0 %v211
    %699 = vmatpush1.msra.mxu0 %v210
    %700 = vmatprep.subr.mxu0 %v215
    %701 = vmatpush1.msra.mxu0 %v214
    %702 = vmatprep.subr.mxu0 %v219
    %703 = vmatpush1.msra.mxu0 %v218
    %704 = vmatprep.subr.mxu0 %v223
    %705 = vmatpush1.msra.mxu0 %v222
    %706 = vmatprep.subr.mxu0 %v227
    %707 = vmatpush1.msra.mxu0 %v226
    %708 = vmatprep.subr.mxu0 %v231
    %709 = vmatpush1.msra.mxu0 %v230
    %710 = vmatprep.subr.mxu0 %v235
    %711 = vmatpush1.msra.mxu0 %v234
    %712 = vmatprep.subr.mxu0 %v239
    %713 = vmatpush1.msra.mxu0 %v238
    %714 = vmatprep.subr.mxu0 %v243
    %715 = vmatpush1.msra.mxu0 %v242
    %716 = vmatprep.mubr.f32.mxu0 %v55
    %717 = vmatmul.mubr.f32.gmra.mrb[0].mxu0 %v54
    %v718 = vpop.f32.mrb[0].mxu0
    %v719 = vadd.f32 %v635, %v718
    %v720 = vpop.f32.mrb[0].mxu0
    %v721 = vadd.f32 %v639, %v720
    %722 = vmatprep.mubr.f32.mxu0 %v63
    %723 = vmatmul.mubr.f32.gmra.mrb[0].mxu0 %v62
    %v724 = vpop.f32.mrb[0].mxu0
    %v725 = vadd.f32 %v635, %v724
    %v726 = vpop.f32.mrb[0].mxu0
    %v727 = vadd.f32 %v639, %v726
    %728 = vmatprep.mubr.f32.mxu0 %v71
    %729 = vmatmul.mubr.f32.gmra.mrb[0].mxu0 %v70
    %v730 = vpop.f32.mrb[0].mxu0
    %v731 = vadd.f32 %v635, %v730
    %v732 = vpop.f32.mrb[0].mxu0
    %v733 = vadd.f32 %v639, %v732
    %734 = vmatprep.mubr.f32.mxu0 %v79
    %735 = vmatmul.mubr.f32.gmra.mrb[0].mxu0 %v78
    %v736 = vpop.f32.mrb[0].mxu0
    %v737 = vadd.f32 %v635, %v736
    %v738 = vpop.f32.mrb[0].mxu0
    %v739 = vadd.f32 %v639, %v738
    %740 = vmatprep.mubr.f32.mxu0 %v87
    %741 = vmatmul.mubr.f32.gmra.mrb[0].mxu0 %v86
    %v742 = vpop.f32.mrb[0].mxu0
    %v743 = vadd.f32 %v635, %v742
    %v744 = vpop.f32.mrb[0].mxu0
    %v745 = vadd.f32 %v639, %v744
    %746 = vmatprep.mubr.f32.mxu0 %v95
    %747 = vmatmul.mubr.f32.gmra.mrb[0].mxu0 %v94
    %v748 = vpop.f32.mrb[0].mxu0
    %v749 = vadd.f32 %v635, %v748
    %v750 = vpop.f32.mrb[0].mxu0
    %v751 = vadd.f32 %v639, %v750
    %752 = vmatprep.mubr.f32.mxu0 %v103
    %753 = vmatmul.mubr.f32.gmra.mrb[0].mxu0 %v102
    %v754 = vpop.f32.mrb[0].mxu0
    %v755 = vadd.f32 %v635, %v754
    %v756 = vpop.f32.mrb[0].mxu0
    %v757 = vadd.f32 %v639, %v756
    %758 = vmatprep.mubr.f32.mxu0 %v111
    %759 = vmatmul.mubr.f32.gmra.mrb[0].mxu0 %v110
    %v760 = vpop.f32.mrb[0].mxu0
    %v761 = vadd.f32 %v635, %v760
    %v762 = vpop.f32.mrb[0].mxu0
    %v763 = vadd.f32 %v639, %v762
    %764 = vdwg.mxu0
    %765 = vmatprep.subr.mxu0 %v247
    %766 = vmatpush1.msra.mxu0 %v246
    %767 = vmatprep.subr.mxu0 %v251
    %768 = vmatpush1.msra.mxu0 %v250
    %769 = vmatprep.subr.mxu0 %v255
    %770 = vmatpush1.msra.mxu0 %v254
    %771 = vmatprep.subr.mxu0 %v259
    %772 = vmatpush1.msra.mxu0 %v258
    %773 = vmatprep.subr.mxu0 %v263
    %774 = vmatpush1.msra.mxu0 %v262
    %775 = vmatprep.subr.mxu0 %v267
    %776 = vmatpush1.msra.mxu0 %v266
    %777 = vmatprep.subr.mxu0 %v271
    %778 = vmatpush1.msra.mxu0 %v270
    %779 = vmatprep.subr.mxu0 %v275
    %780 = vmatpush1.msra.mxu0 %v274
    %781 = vmatprep.subr.mxu0 %v279
    %782 = vmatpush1.msra.mxu0 %v278
    %783 = vmatprep.subr.mxu0 %v283
    %784 = vmatpush1.msra.mxu0 %v282
    %785 = vmatprep.subr.mxu0 %v287
    %786 = vmatpush1.msra.mxu0 %v286
    %787 = vmatprep.subr.mxu0 %v291
    %788 = vmatpush1.msra.mxu0 %v290
    %789 = vmatprep.subr.mxu0 %v295
    %790 = vmatpush1.msra.mxu0 %v294
    %791 = vmatprep.subr.mxu0 %v299
    %792 = vmatpush1.msra.mxu0 %v298
    %793 = vmatprep.subr.mxu0 %v303
    %794 = vmatpush1.msra.mxu0 %v302
    %795 = vmatprep.subr.mxu0 %v307
    %796 = vmatpush1.msra.mxu0 %v306
    %797 = vmatprep.subr.mxu0 %v311
    %798 = vmatpush1.msra.mxu0 %v310
    %799 = vmatprep.subr.mxu0 %v315
    %800 = vmatpush1.msra.mxu0 %v314
    %801 = vmatprep.subr.mxu0 %v319
    %802 = vmatpush1.msra.mxu0 %v318
    %803 = vmatprep.subr.mxu0 %v323
    %804 = vmatpush1.msra.mxu0 %v322
    %805 = vmatprep.subr.mxu0 %v327
    %806 = vmatpush1.msra.mxu0 %v326
    %807 = vmatprep.subr.mxu0 %v331
    %808 = vmatpush1.msra.mxu0 %v330
    %809 = vmatprep.subr.mxu0 %v335
    %810 = vmatpush1.msra.mxu0 %v334
    %811 = vmatprep.subr.mxu0 %v339
    %812 = vmatpush1.msra.mxu0 %v338
    %813 = vmatprep.subr.mxu0 %v343
    %814 = vmatpush1.msra.mxu0 %v342
    %815 = vmatprep.subr.mxu0 %v347
    %816 = vmatpush1.msra.mxu0 %v346
    %817 = vmatprep.subr.mxu0 %v351
    %818 = vmatpush1.msra.mxu0 %v350
    %819 = vmatprep.subr.mxu0 %v355
    %820 = vmatpush1.msra.mxu0 %v354
    %821 = vmatprep.subr.mxu0 %v359
    %822 = vmatpush1.msra.mxu0 %v358
    %823 = vmatprep.subr.mxu0 %v363
    %824 = vmatpush1.msra.mxu0 %v362
    %825 = vmatprep.subr.mxu0 %v367
    %826 = vmatpush1.msra.mxu0 %v366
    %827 = vmatprep.subr.mxu0 %v371
    %828 = vmatpush1.msra.mxu0 %v370
    %829 = vmatprep.mubr.f32.mxu0 %v57
    %830 = vmatmul.mubr.f32.gmra.mrb[0].mxu0 %v56
    %v831 = vpop.f32.mrb[0].mxu0
    %v832 = vadd.f32 %v719, %v831
    %v833 = vpop.f32.mrb[0].mxu0
    %v834 = vadd.f32 %v721, %v833
    %835 = vmatprep.mubr.f32.mxu0 %v65
    %836 = vmatmul.mubr.f32.gmra.mrb[0].mxu0 %v64
    %v837 = vpop.f32.mrb[0].mxu0
    %v838 = vadd.f32 %v725, %v837
    %v839 = vpop.f32.mrb[0].mxu0
    %v840 = vadd.f32 %v727, %v839
    %841 = vmatprep.mubr.f32.mxu0 %v73
    %842 = vmatmul.mubr.f32.gmra.mrb[0].mxu0 %v72
    %v843 = vpop.f32.mrb[0].mxu0
    %v844 = vadd.f32 %v731, %v843
    %v845 = vpop.f32.mrb[0].mxu0
    %v846 = vadd.f32 %v733, %v845
    %847 = vmatprep.mubr.f32.mxu0 %v81
    %848 = vmatmul.mubr.f32.gmra.mrb[0].mxu0 %v80
    %v849 = vpop.f32.mrb[0].mxu0
    %v850 = vadd.f32 %v737, %v849
    %v851 = vpop.f32.mrb[0].mxu0
    %v852 = vadd.f32 %v739, %v851
    %853 = vmatprep.mubr.f32.mxu0 %v89
    %854 = vmatmul.mubr.f32.gmra.mrb[0].mxu0 %v88
    %v855 = vpop.f32.mrb[0].mxu0
    %v856 = vadd.f32 %v743, %v855
    %v857 = vpop.f32.mrb[0].mxu0
    %v858 = vadd.f32 %v745, %v857
    %859 = vmatprep.mubr.f32.mxu0 %v97
    %860 = vmatmul.mubr.f32.gmra.mrb[0].mxu0 %v96
    %v861 = vpop.f32.mrb[0].mxu0
    %v862 = vadd.f32 %v749, %v861
    %v863 = vpop.f32.mrb[0].mxu0
    %v864 = vadd.f32 %v751, %v863
    %865 = vmatprep.mubr.f32.mxu0 %v105
    %866 = vmatmul.mubr.f32.gmra.mrb[0].mxu0 %v104
    %v867 = vpop.f32.mrb[0].mxu0
    %v868 = vadd.f32 %v755, %v867
    %v869 = vpop.f32.mrb[0].mxu0
    %v870 = vadd.f32 %v757, %v869
    %871 = vmatprep.mubr.f32.mxu0 %v113
    %872 = vmatmul.mubr.f32.gmra.mrb[0].mxu0 %v112
    %v873 = vpop.f32.mrb[0].mxu0
    %v874 = vadd.f32 %v761, %v873
    %v875 = vpop.f32.mrb[0].mxu0
    %v876 = vadd.f32 %v763, %v875
    %877 = vdwg.mxu0
    %878 = vmatprep.subr.mxu0 %v375
    %879 = vmatpush1.msra.mxu0 %v374
    %880 = vmatprep.subr.mxu0 %v379
    %881 = vmatpush1.msra.mxu0 %v378
    %882 = vmatprep.subr.mxu0 %v383
    %883 = vmatpush1.msra.mxu0 %v382
    %884 = vmatprep.subr.mxu0 %v387
    %885 = vmatpush1.msra.mxu0 %v386
    %886 = vmatprep.subr.mxu0 %v391
    %887 = vmatpush1.msra.mxu0 %v390
    %888 = vmatprep.subr.mxu0 %v395
    %889 = vmatpush1.msra.mxu0 %v394
    %890 = vmatprep.subr.mxu0 %v399
    %891 = vmatpush1.msra.mxu0 %v398
    %892 = vmatprep.subr.mxu0 %v403
    %893 = vmatpush1.msra.mxu0 %v402
    %894 = vmatprep.subr.mxu0 %v407
    %895 = vmatpush1.msra.mxu0 %v406
    %896 = vmatprep.subr.mxu0 %v411
    %897 = vmatpush1.msra.mxu0 %v410
    %898 = vmatprep.subr.mxu0 %v415
    %899 = vmatpush1.msra.mxu0 %v414
    %900 = vmatprep.subr.mxu0 %v419
    %901 = vmatpush1.msra.mxu0 %v418
    %902 = vmatprep.subr.mxu0 %v423
    %903 = vmatpush1.msra.mxu0 %v422
    %904 = vmatprep.subr.mxu0 %v427
    %905 = vmatpush1.msra.mxu0 %v426
    %906 = vmatprep.subr.mxu0 %v431
    %907 = vmatpush1.msra.mxu0 %v430
    %908 = vmatprep.subr.mxu0 %v435
    %909 = vmatpush1.msra.mxu0 %v434
    %910 = vmatprep.subr.mxu0 %v439
    %911 = vmatpush1.msra.mxu0 %v438
    %912 = vmatprep.subr.mxu0 %v443
    %913 = vmatpush1.msra.mxu0 %v442
    %914 = vmatprep.subr.mxu0 %v447
    %915 = vmatpush1.msra.mxu0 %v446
    %916 = vmatprep.subr.mxu0 %v451
    %917 = vmatpush1.msra.mxu0 %v450
    %918 = vmatprep.subr.mxu0 %v455
    %919 = vmatpush1.msra.mxu0 %v454
    %920 = vmatprep.subr.mxu0 %v459
    %921 = vmatpush1.msra.mxu0 %v458
    %922 = vmatprep.subr.mxu0 %v463
    %923 = vmatpush1.msra.mxu0 %v462
    %924 = vmatprep.subr.mxu0 %v467
    %925 = vmatpush1.msra.mxu0 %v466
    %926 = vmatprep.subr.mxu0 %v471
    %927 = vmatpush1.msra.mxu0 %v470
    %928 = vmatprep.subr.mxu0 %v475
    %929 = vmatpush1.msra.mxu0 %v474
    %930 = vmatprep.subr.mxu0 %v479
    %931 = vmatpush1.msra.mxu0 %v478
    %932 = vmatprep.subr.mxu0 %v483
    %933 = vmatpush1.msra.mxu0 %v482
    %934 = vmatprep.subr.mxu0 %v487
    %935 = vmatpush1.msra.mxu0 %v486
    %936 = vmatprep.subr.mxu0 %v491
    %937 = vmatpush1.msra.mxu0 %v490
    %938 = vmatprep.subr.mxu0 %v495
    %939 = vmatpush1.msra.mxu0 %v494
    %940 = vmatprep.subr.mxu0 %v499
    %941 = vmatpush1.msra.mxu0 %v498
    %942 = vmatprep.mubr.f32.mxu0 %v59
    %943 = vmatmul.mubr.f32.gmra.mrb[0].mxu0 %v58
    %v944 = vpop.f32.mrb[0].mxu0
    %v945 = vadd.f32 %v832, %v944
    %v946 = vpop.f32.mrb[0].mxu0
    %v947 = vadd.f32 %v834, %v946
    %948 = vmatprep.mubr.f32.mxu0 %v67
    %949 = vmatmul.mubr.f32.gmra.mrb[0].mxu0 %v66
    %v950 = vpop.f32.mrb[0].mxu0
    %v951 = vadd.f32 %v838, %v950
    %v952 = vpop.f32.mrb[0].mxu0
    %v953 = vadd.f32 %v840, %v952
    %954 = vmatprep.mubr.f32.mxu0 %v75
    %955 = vmatmul.mubr.f32.gmra.mrb[0].mxu0 %v74
    %v956 = vpop.f32.mrb[0].mxu0
    %v957 = vadd.f32 %v844, %v956
    %v958 = vpop.f32.mrb[0].mxu0
    %v959 = vadd.f32 %v846, %v958
    %960 = vmatprep.mubr.f32.mxu0 %v83
    %961 = vmatmul.mubr.f32.gmra.mrb[0].mxu0 %v82
    %v962 = vpop.f32.mrb[0].mxu0
    %v963 = vadd.f32 %v850, %v962
    %v964 = vpop.f32.mrb[0].mxu0
    %v965 = vadd.f32 %v852, %v964
    %966 = vmatprep.mubr.f32.mxu0 %v91
    %967 = vmatmul.mubr.f32.gmra.mrb[0].mxu0 %v90
    %v968 = vpop.f32.mrb[0].mxu0
    %v969 = vadd.f32 %v856, %v968
    %v970 = vpop.f32.mrb[0].mxu0
    %v971 = vadd.f32 %v858, %v970
    %972 = vmatprep.mubr.f32.mxu0 %v99
    %973 = vmatmul.mubr.f32.gmra.mrb[0].mxu0 %v98
    %v974 = vpop.f32.mrb[0].mxu0
    %v975 = vadd.f32 %v862, %v974
    %v976 = vpop.f32.mrb[0].mxu0
    %v977 = vadd.f32 %v864, %v976
    %978 = vmatprep.mubr.f32.mxu0 %v107
    %979 = vmatmul.mubr.f32.gmra.mrb[0].mxu0 %v106
    %v980 = vpop.f32.mrb[0].mxu0
    %v981 = vadd.f32 %v868, %v980
    %v982 = vpop.f32.mrb[0].mxu0
    %v983 = vadd.f32 %v870, %v982
    %984 = vmatprep.mubr.f32.mxu0 %v115
    %985 = vmatmul.mubr.f32.gmra.mrb[0].mxu0 %v114
    %v986 = vpop.f32.mrb[0].mxu0
    %v987 = vadd.f32 %v874, %v986
    %v988 = vpop.f32.mrb[0].mxu0
    %v989 = vadd.f32 %v876, %v988
    %990 = vdwg.mxu0
    %991 = vmatprep.subr.mxu0 %v503
    %992 = vmatpush1.msra.mxu0 %v502
    %993 = vmatprep.subr.mxu0 %v507
    %994 = vmatpush1.msra.mxu0 %v506
    %995 = vmatprep.subr.mxu0 %v511
    %996 = vmatpush1.msra.mxu0 %v510
    %997 = vmatprep.subr.mxu0 %v515
    %998 = vmatpush1.msra.mxu0 %v514
    %999 = vmatprep.subr.mxu0 %v519
    %1000 = vmatpush1.msra.mxu0 %v518
    %1001 = vmatprep.subr.mxu0 %v523
    %1002 = vmatpush1.msra.mxu0 %v522
    %1003 = vmatprep.subr.mxu0 %v527
    %1004 = vmatpush1.msra.mxu0 %v526
    %1005 = vmatprep.subr.mxu0 %v531
    %1006 = vmatpush1.msra.mxu0 %v530
    %1007 = vmatprep.subr.mxu0 %v535
    %1008 = vmatpush1.msra.mxu0 %v534
    %1009 = vmatprep.subr.mxu0 %v539
    %1010 = vmatpush1.msra.mxu0 %v538
    %1011 = vmatprep.subr.mxu0 %v543
    %1012 = vmatpush1.msra.mxu0 %v542
    %1013 = vmatprep.subr.mxu0 %v547
    %1014 = vmatpush1.msra.mxu0 %v546
    %1015 = vmatprep.subr.mxu0 %v551
    %1016 = vmatpush1.msra.mxu0 %v550
    %1017 = vmatprep.subr.mxu0 %v555
    %1018 = vmatpush1.msra.mxu0 %v554
    %1019 = vmatprep.subr.mxu0 %v559
    %1020 = vmatpush1.msra.mxu0 %v558
    %1021 = vmatprep.subr.mxu0 %v563
    %1022 = vmatpush1.msra.mxu0 %v562
    %1023 = vmatprep.subr.mxu0 %v567
    %1024 = vmatpush1.msra.mxu0 %v566
    %1025 = vmatprep.subr.mxu0 %v571
    %1026 = vmatpush1.msra.mxu0 %v570
    %1027 = vmatprep.subr.mxu0 %v575
    %1028 = vmatpush1.msra.mxu0 %v574
    %1029 = vmatprep.subr.mxu0 %v579
    %1030 = vmatpush1.msra.mxu0 %v578
    %1031 = vmatprep.subr.mxu0 %v583
    %1032 = vmatpush1.msra.mxu0 %v582
    %1033 = vmatprep.subr.mxu0 %v587
    %1034 = vmatpush1.msra.mxu0 %v586
    %1035 = vmatprep.subr.mxu0 %v591
    %1036 = vmatpush1.msra.mxu0 %v590
    %1037 = vmatprep.subr.mxu0 %v595
    %1038 = vmatpush1.msra.mxu0 %v594
    %1039 = vmatprep.subr.mxu0 %v599
    %1040 = vmatpush1.msra.mxu0 %v598
    %1041 = vmatprep.subr.mxu0 %v603
    %1042 = vmatpush1.msra.mxu0 %v602
    %1043 = vmatprep.subr.mxu0 %v607
    %1044 = vmatpush1.msra.mxu0 %v606
    %1045 = vmatprep.subr.mxu0 %v611
    %1046 = vmatpush1.msra.mxu0 %v610
    %1047 = vmatprep.subr.mxu0 %v615
    %1048 = vmatpush1.msra.mxu0 %v614
    %1049 = vmatprep.subr.mxu0 %v619
    %1050 = vmatpush1.msra.mxu0 %v618
    %1051 = vmatprep.subr.mxu0 %v623
    %1052 = vmatpush1.msra.mxu0 %v622
    %1053 = vmatprep.subr.mxu0 %v627
    %1054 = vmatpush1.msra.mxu0 %v626
    %1055 = vmatprep.mubr.f32.mxu0 %v61
    %1056 = vmatmul.mubr.f32.gmra.mrb[0].mxu0 %v60
    %v1057 = vpop.f32.mrb[0].mxu0
    %v1058 = vadd.f32 %v945, %v1057
    %v1059 = vpop.f32.mrb[0].mxu0
    %v1060 = vadd.f32 %v947, %v1059
    %1061 = vmatprep.mubr.f32.mxu0 %v69
    %1062 = vmatmul.mubr.f32.gmra.mrb[0].mxu0 %v68
    %v1063 = vpop.f32.mrb[0].mxu0
    %v1064 = vadd.f32 %v951, %v1063
    %v1065 = vpop.f32.mrb[0].mxu0
    %v1066 = vadd.f32 %v953, %v1065
    %1067 = vmatprep.mubr.f32.mxu0 %v77
    %1068 = vmatmul.mubr.f32.gmra.mrb[0].mxu0 %v76
    %v1069 = vpop.f32.mrb[0].mxu0
    %v1070 = vadd.f32 %v957, %v1069
    %v1071 = vpop.f32.mrb[0].mxu0
    %v1072 = vadd.f32 %v959, %v1071
    %1073 = vmatprep.mubr.f32.mxu0 %v85
    %1074 = vmatmul.mubr.f32.gmra.mrb[0].mxu0 %v84
    %v1075 = vpop.f32.mrb[0].mxu0
    %v1076 = vadd.f32 %v963, %v1075
    %v1077 = vpop.f32.mrb[0].mxu0
    %v1078 = vadd.f32 %v965, %v1077
    %1079 = vmatprep.mubr.f32.mxu0 %v93
    %1080 = vmatmul.mubr.f32.gmra.mrb[0].mxu0 %v92
    %v1081 = vpop.f32.mrb[0].mxu0
    %v1082 = vadd.f32 %v969, %v1081
    %v1083 = vpop.f32.mrb[0].mxu0
    %v1084 = vadd.f32 %v971, %v1083
    %1085 = vmatprep.mubr.f32.mxu0 %v101
    %1086 = vmatmul.mubr.f32.gmra.mrb[0].mxu0 %v100
    %v1087 = vpop.f32.mrb[0].mxu0
    %v1088 = vadd.f32 %v975, %v1087
    %v1089 = vpop.f32.mrb[0].mxu0
    %v1090 = vadd.f32 %v977, %v1089
    %1091 = vmatprep.mubr.f32.mxu0 %v109
    %1092 = vmatmul.mubr.f32.gmra.mrb[0].mxu0 %v108
    %v1093 = vpop.f32.mrb[0].mxu0
    %v1094 = vadd.f32 %v981, %v1093
    %v1095 = vpop.f32.mrb[0].mxu0
    %v1096 = vadd.f32 %v983, %v1095
    %1097 = vmatprep.mubr.f32.mxu0 %v117
    %1098 = vmatmul.mubr.f32.gmra.mrb[0].mxu0 %v116
    %v1099 = vpop.f32.mrb[0].mxu0
    %v1100 = vadd.f32 %v987, %v1099
    %v1101 = vpop.f32.mrb[0].mxu0
    %v1102 = vadd.f32 %v989, %v1101
    %1103 = vdwg.mxu0
    %1104 = vmatprep.subr.mxu0 %v121
    %1105 = vmatpush1.msra.mxu0 %v120
    %1106 = vmatprep.subr.mxu0 %v125
    %1107 = vmatpush1.msra.mxu0 %v124
    %1108 = vmatprep.subr.mxu0 %v129
    %1109 = vmatpush1.msra.mxu0 %v128
    %1110 = vmatprep.subr.mxu0 %v133
    %1111 = vmatpush1.msra.mxu0 %v132
    %1112 = vmatprep.subr.mxu0 %v137
    %1113 = vmatpush1.msra.mxu0 %v136
    %1114 = vmatprep.subr.mxu0 %v141
    %1115 = vmatpush1.msra.mxu0 %v140
    %1116 = vmatprep.subr.mxu0 %v145
    %1117 = vmatpush1.msra.mxu0 %v144
    %1118 = vmatprep.subr.mxu0 %v149
    %1119 = vmatpush1.msra.mxu0 %v148
    %1120 = vmatprep.subr.mxu0 %v153
    %1121 = vmatpush1.msra.mxu0 %v152
    %1122 = vmatprep.subr.mxu0 %v157
    %1123 = vmatpush1.msra.mxu0 %v156
    %1124 = vmatprep.subr.mxu0 %v161
    %1125 = vmatpush1.msra.mxu0 %v160
    %1126 = vmatprep.subr.mxu0 %v165
    %1127 = vmatpush1.msra.mxu0 %v164
    %1128 = vmatprep.subr.mxu0 %v169
    %1129 = vmatpush1.msra.mxu0 %v168
    %1130 = vmatprep.subr.mxu0 %v173
    %1131 = vmatpush1.msra.mxu0 %v172
    %1132 = vmatprep.subr.mxu0 %v177
    %1133 = vmatpush1.msra.mxu0 %v176
    %1134 = vmatprep.subr.mxu0 %v181
    %1135 = vmatpush1.msra.mxu0 %v180
    %1136 = vmatprep.subr.mxu0 %v185
    %1137 = vmatpush1.msra.mxu0 %v184
    %1138 = vmatprep.subr.mxu0 %v189
    %1139 = vmatpush1.msra.mxu0 %v188
    %1140 = vmatprep.subr.mxu0 %v193
    %1141 = vmatpush1.msra.mxu0 %v192
    %1142 = vmatprep.subr.mxu0 %v197
    %1143 = vmatpush1.msra.mxu0 %v196
    %1144 = vmatprep.subr.mxu0 %v201
    %1145 = vmatpush1.msra.mxu0 %v200
    %1146 = vmatprep.subr.mxu0 %v205
    %1147 = vmatpush1.msra.mxu0 %v204
    %1148 = vmatprep.subr.mxu0 %v209
    %1149 = vmatpush1.msra.mxu0 %v208
    %1150 = vmatprep.subr.mxu0 %v213
    %1151 = vmatpush1.msra.mxu0 %v212
    %1152 = vmatprep.subr.mxu0 %v217
    %1153 = vmatpush1.msra.mxu0 %v216
    %1154 = vmatprep.subr.mxu0 %v221
    %1155 = vmatpush1.msra.mxu0 %v220
    %1156 = vmatprep.subr.mxu0 %v225
    %1157 = vmatpush1.msra.mxu0 %v224
    %1158 = vmatprep.subr.mxu0 %v229
    %1159 = vmatpush1.msra.mxu0 %v228
    %1160 = vmatprep.subr.mxu0 %v233
    %1161 = vmatpush1.msra.mxu0 %v232
    %1162 = vmatprep.subr.mxu0 %v237
    %1163 = vmatpush1.msra.mxu0 %v236
    %1164 = vmatprep.subr.mxu0 %v241
    %1165 = vmatpush1.msra.mxu0 %v240
    %1166 = vmatprep.subr.mxu0 %v245
    %1167 = vmatpush1.msra.mxu0 %v244
    %1168 = vmatprep.mubr.f32.mxu0 %v55
    %1169 = vmatmul.mubr.f32.gmra.mrb[0].mxu0 %v54
    %v1170 = vpop.f32.mrb[0].mxu0
    %v1171 = vadd.f32 %v643, %v1170
    %v1172 = vpop.f32.mrb[0].mxu0
    %v1173 = vadd.f32 %v647, %v1172
    %1174 = vmatprep.mubr.f32.mxu0 %v63
    %1175 = vmatmul.mubr.f32.gmra.mrb[0].mxu0 %v62
    %v1176 = vpop.f32.mrb[0].mxu0
    %v1177 = vadd.f32 %v643, %v1176
    %v1178 = vpop.f32.mrb[0].mxu0
    %v1179 = vadd.f32 %v647, %v1178
    %1180 = vmatprep.mubr.f32.mxu0 %v71
    %1181 = vmatmul.mubr.f32.gmra.mrb[0].mxu0 %v70
    %v1182 = vpop.f32.mrb[0].mxu0
    %v1183 = vadd.f32 %v643, %v1182
    %v1184 = vpop.f32.mrb[0].mxu0
    %v1185 = vadd.f32 %v647, %v1184
    %1186 = vmatprep.mubr.f32.mxu0 %v79
    %1187 = vmatmul.mubr.f32.gmra.mrb[0].mxu0 %v78
    %v1188 = vpop.f32.mrb[0].mxu0
    %v1189 = vadd.f32 %v643, %v1188
    %v1190 = vpop.f32.mrb[0].mxu0
    %v1191 = vadd.f32 %v647, %v1190
    %1192 = vmatprep.mubr.f32.mxu0 %v87
    %1193 = vmatmul.mubr.f32.gmra.mrb[0].mxu0 %v86
    %v1194 = vpop.f32.mrb[0].mxu0
    %v1195 = vadd.f32 %v643, %v1194
    %v1196 = vpop.f32.mrb[0].mxu0
    %v1197 = vadd.f32 %v647, %v1196
    %1198 = vmatprep.mubr.f32.mxu0 %v95
    %1199 = vmatmul.mubr.f32.gmra.mrb[0].mxu0 %v94
    %v1200 = vpop.f32.mrb[0].mxu0
    %v1201 = vadd.f32 %v643, %v1200
    %v1202 = vpop.f32.mrb[0].mxu0
    %v1203 = vadd.f32 %v647, %v1202
    %1204 = vmatprep.mubr.f32.mxu0 %v103
    %1205 = vmatmul.mubr.f32.gmra.mrb[0].mxu0 %v102
    %v1206 = vpop.f32.mrb[0].mxu0
    %v1207 = vadd.f32 %v643, %v1206
    %v1208 = vpop.f32.mrb[0].mxu0
    %v1209 = vadd.f32 %v647, %v1208
    %1210 = vmatprep.mubr.f32.mxu0 %v111
    %1211 = vmatmul.mubr.f32.gmra.mrb[0].mxu0 %v110
    %v1212 = vpop.f32.mrb[0].mxu0
    %v1213 = vadd.f32 %v643, %v1212
    %v1214 = vpop.f32.mrb[0].mxu0
    %v1215 = vadd.f32 %v647, %v1214
    %1216 = vdwg.mxu0
    %1217 = vmatprep.subr.mxu0 %v249
    %1218 = vmatpush1.msra.mxu0 %v248
    %1219 = vmatprep.subr.mxu0 %v253
    %1220 = vmatpush1.msra.mxu0 %v252
    %1221 = vmatprep.subr.mxu0 %v257
    %1222 = vmatpush1.msra.mxu0 %v256
    %1223 = vmatprep.subr.mxu0 %v261
    %1224 = vmatpush1.msra.mxu0 %v260
    %1225 = vmatprep.subr.mxu0 %v265
    %1226 = vmatpush1.msra.mxu0 %v264
    %1227 = vmatprep.subr.mxu0 %v269
    %1228 = vmatpush1.msra.mxu0 %v268
    %1229 = vmatprep.subr.mxu0 %v273
    %1230 = vmatpush1.msra.mxu0 %v272
    %1231 = vmatprep.subr.mxu0 %v277
    %1232 = vmatpush1.msra.mxu0 %v276
    %1233 = vmatprep.subr.mxu0 %v281
    %1234 = vmatpush1.msra.mxu0 %v280
    %1235 = vmatprep.subr.mxu0 %v285
    %1236 = vmatpush1.msra.mxu0 %v284
    %1237 = vmatprep.subr.mxu0 %v289
    %1238 = vmatpush1.msra.mxu0 %v288
    %1239 = vmatprep.subr.mxu0 %v293
    %1240 = vmatpush1.msra.mxu0 %v292
    %1241 = vmatprep.subr.mxu0 %v297
    %1242 = vmatpush1.msra.mxu0 %v296
    %1243 = vmatprep.subr.mxu0 %v301
    %1244 = vmatpush1.msra.mxu0 %v300
    %1245 = vmatprep.subr.mxu0 %v305
    %1246 = vmatpush1.msra.mxu0 %v304
    %1247 = vmatprep.subr.mxu0 %v309
    %1248 = vmatpush1.msra.mxu0 %v308
    %1249 = vmatprep.subr.mxu0 %v313
    %1250 = vmatpush1.msra.mxu0 %v312
    %1251 = vmatprep.subr.mxu0 %v317
    %1252 = vmatpush1.msra.mxu0 %v316
    %1253 = vmatprep.subr.mxu0 %v321
    %1254 = vmatpush1.msra.mxu0 %v320
    %1255 = vmatprep.subr.mxu0 %v325
    %1256 = vmatpush1.msra.mxu0 %v324
    %1257 = vmatprep.subr.mxu0 %v329
    %1258 = vmatpush1.msra.mxu0 %v328
    %1259 = vmatprep.subr.mxu0 %v333
    %1260 = vmatpush1.msra.mxu0 %v332
    %1261 = vmatprep.subr.mxu0 %v337
    %1262 = vmatpush1.msra.mxu0 %v336
    %1263 = vmatprep.subr.mxu0 %v341
    %1264 = vmatpush1.msra.mxu0 %v340
    %1265 = vmatprep.subr.mxu0 %v345
    %1266 = vmatpush1.msra.mxu0 %v344
    %1267 = vmatprep.subr.mxu0 %v349
    %1268 = vmatpush1.msra.mxu0 %v348
    %1269 = vmatprep.subr.mxu0 %v353
    %1270 = vmatpush1.msra.mxu0 %v352
    %1271 = vmatprep.subr.mxu0 %v357
    %1272 = vmatpush1.msra.mxu0 %v356
    %1273 = vmatprep.subr.mxu0 %v361
    %1274 = vmatpush1.msra.mxu0 %v360
    %1275 = vmatprep.subr.mxu0 %v365
    %1276 = vmatpush1.msra.mxu0 %v364
    %1277 = vmatprep.subr.mxu0 %v369
    %1278 = vmatpush1.msra.mxu0 %v368
    %1279 = vmatprep.subr.mxu0 %v373
    %1280 = vmatpush1.msra.mxu0 %v372
    %1281 = vmatprep.mubr.f32.mxu0 %v57
    %1282 = vmatmul.mubr.f32.gmra.mrb[0].mxu0 %v56
    %v1283 = vpop.f32.mrb[0].mxu0
    %v1284 = vadd.f32 %v1171, %v1283
    %v1285 = vpop.f32.mrb[0].mxu0
    %v1286 = vadd.f32 %v1173, %v1285
    %1287 = vmatprep.mubr.f32.mxu0 %v65
    %1288 = vmatmul.mubr.f32.gmra.mrb[0].mxu0 %v64
    %v1289 = vpop.f32.mrb[0].mxu0
    %v1290 = vadd.f32 %v1177, %v1289
    %v1291 = vpop.f32.mrb[0].mxu0
    %v1292 = vadd.f32 %v1179, %v1291
    %1293 = vmatprep.mubr.f32.mxu0 %v73
    %1294 = vmatmul.mubr.f32.gmra.mrb[0].mxu0 %v72
    %v1295 = vpop.f32.mrb[0].mxu0
    %v1296 = vadd.f32 %v1183, %v1295
    %v1297 = vpop.f32.mrb[0].mxu0
    %v1298 = vadd.f32 %v1185, %v1297
    %1299 = vmatprep.mubr.f32.mxu0 %v81
    %1300 = vmatmul.mubr.f32.gmra.mrb[0].mxu0 %v80
    %v1301 = vpop.f32.mrb[0].mxu0
    %v1302 = vadd.f32 %v1189, %v1301
    %v1303 = vpop.f32.mrb[0].mxu0
    %v1304 = vadd.f32 %v1191, %v1303
    %1305 = vmatprep.mubr.f32.mxu0 %v89
    %1306 = vmatmul.mubr.f32.gmra.mrb[0].mxu0 %v88
    %v1307 = vpop.f32.mrb[0].mxu0
    %v1308 = vadd.f32 %v1195, %v1307
    %v1309 = vpop.f32.mrb[0].mxu0
    %v1310 = vadd.f32 %v1197, %v1309
    %1311 = vmatprep.mubr.f32.mxu0 %v97
    %1312 = vmatmul.mubr.f32.gmra.mrb[0].mxu0 %v96
    %v1313 = vpop.f32.mrb[0].mxu0
    %v1314 = vadd.f32 %v1201, %v1313
    %v1315 = vpop.f32.mrb[0].mxu0
    %v1316 = vadd.f32 %v1203, %v1315
    %1317 = vmatprep.mubr.f32.mxu0 %v105
    %1318 = vmatmul.mubr.f32.gmra.mrb[0].mxu0 %v104
    %v1319 = vpop.f32.mrb[0].mxu0
    %v1320 = vadd.f32 %v1207, %v1319
    %v1321 = vpop.f32.mrb[0].mxu0
    %v1322 = vadd.f32 %v1209, %v1321
    %1323 = vmatprep.mubr.f32.mxu0 %v113
    %1324 = vmatmul.mubr.f32.gmra.mrb[0].mxu0 %v112
    %v1325 = vpop.f32.mrb[0].mxu0
    %v1326 = vadd.f32 %v1213, %v1325
    %v1327 = vpop.f32.mrb[0].mxu0
    %v1328 = vadd.f32 %v1215, %v1327
    %1329 = vdwg.mxu0
    %1330 = vmatprep.subr.mxu0 %v377
    %1331 = vmatpush1.msra.mxu0 %v376
    %1332 = vmatprep.subr.mxu0 %v381
    %1333 = vmatpush1.msra.mxu0 %v380
    %1334 = vmatprep.subr.mxu0 %v385
    %1335 = vmatpush1.msra.mxu0 %v384
    %1336 = vmatprep.subr.mxu0 %v389
    %1337 = vmatpush1.msra.mxu0 %v388
    %1338 = vmatprep.subr.mxu0 %v393
    %1339 = vmatpush1.msra.mxu0 %v392
    %1340 = vmatprep.subr.mxu0 %v397
    %1341 = vmatpush1.msra.mxu0 %v396
    %1342 = vmatprep.subr.mxu0 %v401
    %1343 = vmatpush1.msra.mxu0 %v400
    %1344 = vmatprep.subr.mxu0 %v405
    %1345 = vmatpush1.msra.mxu0 %v404
    %1346 = vmatprep.subr.mxu0 %v409
    %1347 = vmatpush1.msra.mxu0 %v408
    %1348 = vmatprep.subr.mxu0 %v413
    %1349 = vmatpush1.msra.mxu0 %v412
    %1350 = vmatprep.subr.mxu0 %v417
    %1351 = vmatpush1.msra.mxu0 %v416
    %1352 = vmatprep.subr.mxu0 %v421
    %1353 = vmatpush1.msra.mxu0 %v420
    %1354 = vmatprep.subr.mxu0 %v425
    %1355 = vmatpush1.msra.mxu0 %v424
    %1356 = vmatprep.subr.mxu0 %v429
    %1357 = vmatpush1.msra.mxu0 %v428
    %1358 = vmatprep.subr.mxu0 %v433
    %1359 = vmatpush1.msra.mxu0 %v432
    %1360 = vmatprep.subr.mxu0 %v437
    %1361 = vmatpush1.msra.mxu0 %v436
    %1362 = vmatprep.subr.mxu0 %v441
    %1363 = vmatpush1.msra.mxu0 %v440
    %1364 = vmatprep.subr.mxu0 %v445
    %1365 = vmatpush1.msra.mxu0 %v444
    %1366 = vmatprep.subr.mxu0 %v449
    %1367 = vmatpush1.msra.mxu0 %v448
    %1368 = vmatprep.subr.mxu0 %v453
    %1369 = vmatpush1.msra.mxu0 %v452
    %1370 = vmatprep.subr.mxu0 %v457
    %1371 = vmatpush1.msra.mxu0 %v456
    %1372 = vmatprep.subr.mxu0 %v461
    %1373 = vmatpush1.msra.mxu0 %v460
    %1374 = vmatprep.subr.mxu0 %v465
    %1375 = vmatpush1.msra.mxu0 %v464
    %1376 = vmatprep.subr.mxu0 %v469
    %1377 = vmatpush1.msra.mxu0 %v468
    %1378 = vmatprep.subr.mxu0 %v473
    %1379 = vmatpush1.msra.mxu0 %v472
    %1380 = vmatprep.subr.mxu0 %v477
    %1381 = vmatpush1.msra.mxu0 %v476
    %1382 = vmatprep.subr.mxu0 %v481
    %1383 = vmatpush1.msra.mxu0 %v480
    %1384 = vmatprep.subr.mxu0 %v485
    %1385 = vmatpush1.msra.mxu0 %v484
    %1386 = vmatprep.subr.mxu0 %v489
    %1387 = vmatpush1.msra.mxu0 %v488
    %1388 = vmatprep.subr.mxu0 %v493
    %1389 = vmatpush1.msra.mxu0 %v492
    %1390 = vmatprep.subr.mxu0 %v497
    %1391 = vmatpush1.msra.mxu0 %v496
    %1392 = vmatprep.subr.mxu0 %v501
    %1393 = vmatpush1.msra.mxu0 %v500
    %1394 = vmatprep.mubr.f32.mxu0 %v59
    %1395 = vmatmul.mubr.f32.gmra.mrb[0].mxu0 %v58
    %v1396 = vpop.f32.mrb[0].mxu0
    %v1397 = vadd.f32 %v1284, %v1396
    %v1398 = vpop.f32.mrb[0].mxu0
    %v1399 = vadd.f32 %v1286, %v1398
    %1400 = vmatprep.mubr.f32.mxu0 %v67
    %1401 = vmatmul.mubr.f32.gmra.mrb[0].mxu0 %v66
    %v1402 = vpop.f32.mrb[0].mxu0
    %v1403 = vadd.f32 %v1290, %v1402
    %v1404 = vpop.f32.mrb[0].mxu0
    %v1405 = vadd.f32 %v1292, %v1404
    %1406 = vmatprep.mubr.f32.mxu0 %v75
    %1407 = vmatmul.mubr.f32.gmra.mrb[0].mxu0 %v74
    %v1408 = vpop.f32.mrb[0].mxu0
    %v1409 = vadd.f32 %v1296, %v1408
    %v1410 = vpop.f32.mrb[0].mxu0
    %v1411 = vadd.f32 %v1298, %v1410
    %1412 = vmatprep.mubr.f32.mxu0 %v83
    %1413 = vmatmul.mubr.f32.gmra.mrb[0].mxu0 %v82
    %v1414 = vpop.f32.mrb[0].mxu0
    %v1415 = vadd.f32 %v1302, %v1414
    %v1416 = vpop.f32.mrb[0].mxu0
    %v1417 = vadd.f32 %v1304, %v1416
    %1418 = vmatprep.mubr.f32.mxu0 %v91
    %1419 = vmatmul.mubr.f32.gmra.mrb[0].mxu0 %v90
    %v1420 = vpop.f32.mrb[0].mxu0
    %v1421 = vadd.f32 %v1308, %v1420
    %v1422 = vpop.f32.mrb[0].mxu0
    %v1423 = vadd.f32 %v1310, %v1422
    %1424 = vmatprep.mubr.f32.mxu0 %v99
    %1425 = vmatmul.mubr.f32.gmra.mrb[0].mxu0 %v98
    %v1426 = vpop.f32.mrb[0].mxu0
    %v1427 = vadd.f32 %v1314, %v1426
    %v1428 = vpop.f32.mrb[0].mxu0
    %v1429 = vadd.f32 %v1316, %v1428
    %1430 = vmatprep.mubr.f32.mxu0 %v107
    %1431 = vmatmul.mubr.f32.gmra.mrb[0].mxu0 %v106
    %v1432 = vpop.f32.mrb[0].mxu0
    %v1433 = vadd.f32 %v1320, %v1432
    %v1434 = vpop.f32.mrb[0].mxu0
    %v1435 = vadd.f32 %v1322, %v1434
    %1436 = vmatprep.mubr.f32.mxu0 %v115
    %1437 = vmatmul.mubr.f32.gmra.mrb[0].mxu0 %v114
    %v1438 = vpop.f32.mrb[0].mxu0
    %v1439 = vadd.f32 %v1326, %v1438
    %v1440 = vpop.f32.mrb[0].mxu0
    %v1441 = vadd.f32 %v1328, %v1440
    %1442 = vdwg.mxu0
    %1443 = vmatprep.subr.mxu0 %v505
    %1444 = vmatpush1.msra.mxu0 %v504
    %1445 = vmatprep.subr.mxu0 %v509
    %1446 = vmatpush1.msra.mxu0 %v508
    %1447 = vmatprep.subr.mxu0 %v513
    %1448 = vmatpush1.msra.mxu0 %v512
    %1449 = vmatprep.subr.mxu0 %v517
    %1450 = vmatpush1.msra.mxu0 %v516
    %1451 = vmatprep.subr.mxu0 %v521
    %1452 = vmatpush1.msra.mxu0 %v520
    %1453 = vmatprep.subr.mxu0 %v525
    %1454 = vmatpush1.msra.mxu0 %v524
    %1455 = vmatprep.subr.mxu0 %v529
    %1456 = vmatpush1.msra.mxu0 %v528
    %1457 = vmatprep.subr.mxu0 %v533
    %1458 = vmatpush1.msra.mxu0 %v532
    %1459 = vmatprep.subr.mxu0 %v537
    %1460 = vmatpush1.msra.mxu0 %v536
    %1461 = vmatprep.subr.mxu0 %v541
    %1462 = vmatpush1.msra.mxu0 %v540
    %1463 = vmatprep.subr.mxu0 %v545
    %1464 = vmatpush1.msra.mxu0 %v544
    %1465 = vmatprep.subr.mxu0 %v549
    %1466 = vmatpush1.msra.mxu0 %v548
    %1467 = vmatprep.subr.mxu0 %v553
    %1468 = vmatpush1.msra.mxu0 %v552
    %1469 = vmatprep.subr.mxu0 %v557
    %1470 = vmatpush1.msra.mxu0 %v556
    %1471 = vmatprep.subr.mxu0 %v561
    %1472 = vmatpush1.msra.mxu0 %v560
    %1473 = vmatprep.subr.mxu0 %v565
    %1474 = vmatpush1.msra.mxu0 %v564
    %1475 = vmatprep.subr.mxu0 %v569
    %1476 = vmatpush1.msra.mxu0 %v568
    %1477 = vmatprep.subr.mxu0 %v573
    %1478 = vmatpush1.msra.mxu0 %v572
    %1479 = vmatprep.subr.mxu0 %v577
    %1480 = vmatpush1.msra.mxu0 %v576
    %1481 = vmatprep.subr.mxu0 %v581
    %1482 = vmatpush1.msra.mxu0 %v580
    %1483 = vmatprep.subr.mxu0 %v585
    %1484 = vmatpush1.msra.mxu0 %v584
    %1485 = vmatprep.subr.mxu0 %v589
    %1486 = vmatpush1.msra.mxu0 %v588
    %1487 = vmatprep.subr.mxu0 %v593
    %1488 = vmatpush1.msra.mxu0 %v592
    %1489 = vmatprep.subr.mxu0 %v597
    %1490 = vmatpush1.msra.mxu0 %v596
    %1491 = vmatprep.subr.mxu0 %v601
    %1492 = vmatpush1.msra.mxu0 %v600
    %1493 = vmatprep.subr.mxu0 %v605
    %1494 = vmatpush1.msra.mxu0 %v604
    %1495 = vmatprep.subr.mxu0 %v609
    %1496 = vmatpush1.msra.mxu0 %v608
    %1497 = vmatprep.subr.mxu0 %v613
    %1498 = vmatpush1.msra.mxu0 %v612
    %1499 = vmatprep.subr.mxu0 %v617
    %1500 = vmatpush1.msra.mxu0 %v616
    %1501 = vmatprep.subr.mxu0 %v621
    %1502 = vmatpush1.msra.mxu0 %v620
    %1503 = vmatprep.subr.mxu0 %v625
    %1504 = vmatpush1.msra.mxu0 %v624
    %1505 = vmatprep.subr.mxu0 %v629
    %1506 = vmatpush1.msra.mxu0 %v628
    %1507 = vmatprep.mubr.f32.mxu0 %v61
    %1508 = vmatmul.mubr.f32.gmra.mrb[0].mxu0 %v60
    %v1509 = vpop.f32.mrb[0].mxu0
    %v1510 = vadd.f32 %v1397, %v1509
    %v1511 = vpop.f32.mrb[0].mxu0
    %v1512 = vadd.f32 %v1399, %v1511
    %1513 = vmatprep.mubr.f32.mxu0 %v69
    %1514 = vmatmul.mubr.f32.gmra.mrb[0].mxu0 %v68
    %v1515 = vpop.f32.mrb[0].mxu0
    %v1516 = vadd.f32 %v1403, %v1515
    %v1517 = vpop.f32.mrb[0].mxu0
    %v1518 = vadd.f32 %v1405, %v1517
    %1519 = vmatprep.mubr.f32.mxu0 %v77
    %1520 = vmatmul.mubr.f32.gmra.mrb[0].mxu0 %v76
    %v1521 = vpop.f32.mrb[0].mxu0
    %v1522 = vadd.f32 %v1409, %v1521
    %v1523 = vpop.f32.mrb[0].mxu0
    %v1524 = vadd.f32 %v1411, %v1523
    %1525 = vmatprep.mubr.f32.mxu0 %v85
    %1526 = vmatmul.mubr.f32.gmra.mrb[0].mxu0 %v84
    %v1527 = vpop.f32.mrb[0].mxu0
    %v1528 = vadd.f32 %v1415, %v1527
    %v1529 = vpop.f32.mrb[0].mxu0
    %v1530 = vadd.f32 %v1417, %v1529
    %1531 = vmatprep.mubr.f32.mxu0 %v93
    %1532 = vmatmul.mubr.f32.gmra.mrb[0].mxu0 %v92
    %v1533 = vpop.f32.mrb[0].mxu0
    %v1534 = vadd.f32 %v1421, %v1533
    %v1535 = vpop.f32.mrb[0].mxu0
    %v1536 = vadd.f32 %v1423, %v1535
    %1537 = vmatprep.mubr.f32.mxu0 %v101
    %1538 = vmatmul.mubr.f32.gmra.mrb[0].mxu0 %v100
    %v1539 = vpop.f32.mrb[0].mxu0
    %v1540 = vadd.f32 %v1427, %v1539
    %v1541 = vpop.f32.mrb[0].mxu0
    %v1542 = vadd.f32 %v1429, %v1541
    %1543 = vmatprep.mubr.f32.mxu0 %v109
    %1544 = vmatmul.mubr.f32.gmra.mrb[0].mxu0 %v108
    %v1545 = vpop.f32.mrb[0].mxu0
    %v1546 = vadd.f32 %v1433, %v1545
    %v1547 = vpop.f32.mrb[0].mxu0
    %v1548 = vadd.f32 %v1435, %v1547
    %1549 = vmatprep.mubr.f32.mxu0 %v117
    %1550 = vmatmul.mubr.f32.gmra.mrb[0].mxu0 %v116
    %v1551 = vpop.f32.mrb[0].mxu0
    %v1552 = vadd.f32 %v1439, %v1551
    %v1553 = vpop.f32.mrb[0].mxu0
    %v1554 = vadd.f32 %v1441, %v1553
    %1555 = vdwg.mxu0
    %v1556 = vmul.f32 %v1058, 0.5
    %v1557 = vmul.f32 %v1060, 0.5
    %v1558 = vmul.f32 %v1510, 0.5
    %v1559 = vmul.f32 %v1512, 0.5
    %v1560 = vmul.f32 %v1064, 0.5
    %v1561 = vmul.f32 %v1066, 0.5
    %v1562 = vmul.f32 %v1516, 0.5
    %v1563 = vmul.f32 %v1518, 0.5
    %v1564 = vmul.f32 %v1070, 0.5
    %v1565 = vmul.f32 %v1072, 0.5
    %v1566 = vmul.f32 %v1522, 0.5
    %v1567 = vmul.f32 %v1524, 0.5
    %v1568 = vmul.f32 %v1076, 0.5
    %v1569 = vmul.f32 %v1078, 0.5
    %v1570 = vmul.f32 %v1528, 0.5
    %v1571 = vmul.f32 %v1530, 0.5
    %v1572 = vmul.f32 %v1082, 0.5
    %v1573 = vmul.f32 %v1084, 0.5
    %v1574 = vmul.f32 %v1534, 0.5
    %v1575 = vmul.f32 %v1536, 0.5
    %v1576 = vmul.f32 %v1088, 0.5
    %v1577 = vmul.f32 %v1090, 0.5
    %v1578 = vmul.f32 %v1540, 0.5
    %v1579 = vmul.f32 %v1542, 0.5
    %v1580 = vmul.f32 %v1094, 0.5
    %v1581 = vmul.f32 %v1096, 0.5
    %v1582 = vmul.f32 %v1546, 0.5
    %v1583 = vmul.f32 %v1548, 0.5
    %v1584 = vmul.f32 %v1100, 0.5
    %v1585 = vmul.f32 %v1102, 0.5
    %v1586 = vmul.f32 %v1552, 0.5
    %v1587 = vmul.f32 %v1554, 0.5
    %v1588 = vmax.f32 %v1556, -2.0
    %v1589 = vmax.f32 %v1557, -2.0
    %v1590 = vmax.f32 %v1558, -2.0
    %v1591 = vmax.f32 %v1559, -2.0
    %v1592 = vmax.f32 %v1560, -2.0
    %v1593 = vmax.f32 %v1561, -2.0
    %v1594 = vmax.f32 %v1562, -2.0
    %v1595 = vmax.f32 %v1563, -2.0
    %v1596 = vmax.f32 %v1564, -2.0
    %v1597 = vmax.f32 %v1565, -2.0
    %v1598 = vmax.f32 %v1566, -2.0
    %v1599 = vmax.f32 %v1567, -2.0
    %v1600 = vmax.f32 %v1568, -2.0
    %v1601 = vmax.f32 %v1569, -2.0
    %v1602 = vmax.f32 %v1570, -2.0
    %v1603 = vmax.f32 %v1571, -2.0
    %v1604 = vmax.f32 %v1572, -2.0
    %v1605 = vmax.f32 %v1573, -2.0
    %v1606 = vmax.f32 %v1574, -2.0
    %v1607 = vmax.f32 %v1575, -2.0
    %v1608 = vmax.f32 %v1576, -2.0
    %v1609 = vmax.f32 %v1577, -2.0
    %v1610 = vmax.f32 %v1578, -2.0
    %v1611 = vmax.f32 %v1579, -2.0
    %v1612 = vmax.f32 %v1580, -2.0
    %v1613 = vmax.f32 %v1581, -2.0
    %v1614 = vmax.f32 %v1582, -2.0
    %v1615 = vmax.f32 %v1583, -2.0
    %v1616 = vmax.f32 %v1584, -2.0
    %v1617 = vmax.f32 %v1585, -2.0
    %v1618 = vmax.f32 %v1586, -2.0
    %v1619 = vmax.f32 %v1587, -2.0
    %v1620 = vmin.f32 %v1588, 2.0
    %v1621 = vmin.f32 %v1589, 2.0
    %v1622 = vmin.f32 %v1590, 2.0
    %v1623 = vmin.f32 %v1591, 2.0
    %v1624 = vmin.f32 %v1592, 2.0
    %v1625 = vmin.f32 %v1593, 2.0
    %v1626 = vmin.f32 %v1594, 2.0
    %v1627 = vmin.f32 %v1595, 2.0
    %v1628 = vmin.f32 %v1596, 2.0
    %v1629 = vmin.f32 %v1597, 2.0
    %v1630 = vmin.f32 %v1598, 2.0
    %v1631 = vmin.f32 %v1599, 2.0
    %v1632 = vmin.f32 %v1600, 2.0
    %v1633 = vmin.f32 %v1601, 2.0
    %v1634 = vmin.f32 %v1602, 2.0
    %v1635 = vmin.f32 %v1603, 2.0
    %v1636 = vmin.f32 %v1604, 2.0
    %v1637 = vmin.f32 %v1605, 2.0
    %v1638 = vmin.f32 %v1606, 2.0
    %v1639 = vmin.f32 %v1607, 2.0
    %v1640 = vmin.f32 %v1608, 2.0
    %v1641 = vmin.f32 %v1609, 2.0
    %v1642 = vmin.f32 %v1610, 2.0
    %v1643 = vmin.f32 %v1611, 2.0
    %v1644 = vmin.f32 %v1612, 2.0
    %v1645 = vmin.f32 %v1613, 2.0
    %v1646 = vmin.f32 %v1614, 2.0
    %v1647 = vmin.f32 %v1615, 2.0
    %v1648 = vmin.f32 %v1616, 2.0
    %v1649 = vmin.f32 %v1617, 2.0
    %v1650 = vmin.f32 %v1618, 2.0
    %v1651 = vmin.f32 %v1619, 2.0
    %v1652 = vmul.f32 %v1620, 0.5
    %v1653 = vmul.f32 %v1621, 0.5
    %v1654 = vmul.f32 %v1622, 0.5
    %v1655 = vmul.f32 %v1623, 0.5
    %v1656 = vmul.f32 %v1624, 0.5
    %v1657 = vmul.f32 %v1625, 0.5
    %v1658 = vmul.f32 %v1626, 0.5
    %v1659 = vmul.f32 %v1627, 0.5
    %v1660 = vmul.f32 %v1628, 0.5
    %v1661 = vmul.f32 %v1629, 0.5
    %v1662 = vmul.f32 %v1630, 0.5
    %v1663 = vmul.f32 %v1631, 0.5
    %v1664 = vmul.f32 %v1632, 0.5
    %v1665 = vmul.f32 %v1633, 0.5
    %v1666 = vmul.f32 %v1634, 0.5
    %v1667 = vmul.f32 %v1635, 0.5
    %v1668 = vmul.f32 %v1636, 0.5
    %v1669 = vmul.f32 %v1637, 0.5
    %v1670 = vmul.f32 %v1638, 0.5
    %v1671 = vmul.f32 %v1639, 0.5
    %v1672 = vmul.f32 %v1640, 0.5
    %v1673 = vmul.f32 %v1641, 0.5
    %v1674 = vmul.f32 %v1642, 0.5
    %v1675 = vmul.f32 %v1643, 0.5
    %v1676 = vmul.f32 %v1644, 0.5
    %v1677 = vmul.f32 %v1645, 0.5
    %v1678 = vmul.f32 %v1646, 0.5
    %v1679 = vmul.f32 %v1647, 0.5
    %v1680 = vmul.f32 %v1648, 0.5
    %v1681 = vmul.f32 %v1649, 0.5
    %v1682 = vmul.f32 %v1650, 0.5
    %v1683 = vmul.f32 %v1651, 0.5
    %v1684 = vmul.f32 %v1620, 0.70710677
    %v1685 = vmul.f32 %v1621, 0.70710677
    %v1686 = vmul.f32 %v1622, 0.70710677
    %v1687 = vmul.f32 %v1623, 0.70710677
    %v1688 = vmul.f32 %v1624, 0.70710677
    %v1689 = vmul.f32 %v1625, 0.70710677
    %v1690 = vmul.f32 %v1626, 0.70710677
    %v1691 = vmul.f32 %v1627, 0.70710677
    %v1692 = vmul.f32 %v1628, 0.70710677
    %v1693 = vmul.f32 %v1629, 0.70710677
    %v1694 = vmul.f32 %v1630, 0.70710677
    %v1695 = vmul.f32 %v1631, 0.70710677
    %v1696 = vmul.f32 %v1632, 0.70710677
    %v1697 = vmul.f32 %v1633, 0.70710677
    %v1698 = vmul.f32 %v1634, 0.70710677
    %v1699 = vmul.f32 %v1635, 0.70710677
    %v1700 = vmul.f32 %v1636, 0.70710677
    %v1701 = vmul.f32 %v1637, 0.70710677
    %v1702 = vmul.f32 %v1638, 0.70710677
    %v1703 = vmul.f32 %v1639, 0.70710677
    %v1704 = vmul.f32 %v1640, 0.70710677
    %v1705 = vmul.f32 %v1641, 0.70710677
    %v1706 = vmul.f32 %v1642, 0.70710677
    %v1707 = vmul.f32 %v1643, 0.70710677
    %v1708 = vmul.f32 %v1644, 0.70710677
    %v1709 = vmul.f32 %v1645, 0.70710677
    %v1710 = vmul.f32 %v1646, 0.70710677
    %v1711 = vmul.f32 %v1647, 0.70710677
    %v1712 = vmul.f32 %v1648, 0.70710677
    %v1713 = vmul.f32 %v1649, 0.70710677
    %v1714 = vmul.f32 %v1650, 0.70710677
    %v1715 = vmul.f32 %v1651, 0.70710677
    %v1716 = verf.f32.pop %v1684
    %v1717 = verf.f32.pop %v1685
    %v1718 = verf.f32.pop %v1686
    %v1719 = verf.f32.pop %v1687
    %v1720 = verf.f32.pop %v1688
    %v1721 = verf.f32.pop %v1689
    %v1722 = verf.f32.pop %v1690
    %v1723 = verf.f32.pop %v1691
    %v1724 = verf.f32.pop %v1692
    %v1725 = verf.f32.pop %v1693
    %v1726 = verf.f32.pop %v1694
    %v1727 = verf.f32.pop %v1695
    %v1728 = verf.f32.pop %v1696
    %v1729 = verf.f32.pop %v1697
    %v1730 = verf.f32.pop %v1698
    %v1731 = verf.f32.pop %v1699
    %v1732 = verf.f32.pop %v1700
    %v1733 = verf.f32.pop %v1701
    %v1734 = verf.f32.pop %v1702
    %v1735 = verf.f32.pop %v1703
    %v1736 = verf.f32.pop %v1704
    %v1737 = verf.f32.pop %v1705
    %v1738 = verf.f32.pop %v1706
    %v1739 = verf.f32.pop %v1707
    %v1740 = verf.f32.pop %v1708
    %v1741 = verf.f32.pop %v1709
    %v1742 = verf.f32.pop %v1710
    %v1743 = verf.f32.pop %v1711
    %v1744 = verf.f32.pop %v1712
    %v1745 = verf.f32.pop %v1713
    %v1746 = verf.f32.pop %v1714
    %v1747 = verf.f32.pop %v1715
    %v1748 = vadd.f32 %v1716, 1.0
    %v1749 = vadd.f32 %v1717, 1.0
    %v1750 = vadd.f32 %v1718, 1.0
    %v1751 = vadd.f32 %v1719, 1.0
    %v1752 = vadd.f32 %v1720, 1.0
    %v1753 = vadd.f32 %v1721, 1.0
    %v1754 = vadd.f32 %v1722, 1.0
    %v1755 = vadd.f32 %v1723, 1.0
    %v1756 = vadd.f32 %v1724, 1.0
    %v1757 = vadd.f32 %v1725, 1.0
    %v1758 = vadd.f32 %v1726, 1.0
    %v1759 = vadd.f32 %v1727, 1.0
    %v1760 = vadd.f32 %v1728, 1.0
    %v1761 = vadd.f32 %v1729, 1.0
    %v1762 = vadd.f32 %v1730, 1.0
    %v1763 = vadd.f32 %v1731, 1.0
    %v1764 = vadd.f32 %v1732, 1.0
    %v1765 = vadd.f32 %v1733, 1.0
    %v1766 = vadd.f32 %v1734, 1.0
    %v1767 = vadd.f32 %v1735, 1.0
    %v1768 = vadd.f32 %v1736, 1.0
    %v1769 = vadd.f32 %v1737, 1.0
    %v1770 = vadd.f32 %v1738, 1.0
    %v1771 = vadd.f32 %v1739, 1.0
    %v1772 = vadd.f32 %v1740, 1.0
    %v1773 = vadd.f32 %v1741, 1.0
    %v1774 = vadd.f32 %v1742, 1.0
    %v1775 = vadd.f32 %v1743, 1.0
    %v1776 = vadd.f32 %v1744, 1.0
    %v1777 = vadd.f32 %v1745, 1.0
    %v1778 = vadd.f32 %v1746, 1.0
    %v1779 = vadd.f32 %v1747, 1.0
    %v1780 = vmul.f32 %v1652, %v1748
    %v1781 = vmul.f32 %v1653, %v1749
    %v1782 = vmul.f32 %v1654, %v1750
    %v1783 = vmul.f32 %v1655, %v1751
    %v1784 = vmul.f32 %v1656, %v1752
    %v1785 = vmul.f32 %v1657, %v1753
    %v1786 = vmul.f32 %v1658, %v1754
    %v1787 = vmul.f32 %v1659, %v1755
    %v1788 = vmul.f32 %v1660, %v1756
    %v1789 = vmul.f32 %v1661, %v1757
    %v1790 = vmul.f32 %v1662, %v1758
    %v1791 = vmul.f32 %v1663, %v1759
    %v1792 = vmul.f32 %v1664, %v1760
    %v1793 = vmul.f32 %v1665, %v1761
    %v1794 = vmul.f32 %v1666, %v1762
    %v1795 = vmul.f32 %v1667, %v1763
    %v1796 = vmul.f32 %v1668, %v1764
    %v1797 = vmul.f32 %v1669, %v1765
    %v1798 = vmul.f32 %v1670, %v1766
    %v1799 = vmul.f32 %v1671, %v1767
    %v1800 = vmul.f32 %v1672, %v1768
    %v1801 = vmul.f32 %v1673, %v1769
    %v1802 = vmul.f32 %v1674, %v1770
    %v1803 = vmul.f32 %v1675, %v1771
    %v1804 = vmul.f32 %v1676, %v1772
    %v1805 = vmul.f32 %v1677, %v1773
    %v1806 = vmul.f32 %v1678, %v1774
    %v1807 = vmul.f32 %v1679, %v1775
    %v1808 = vmul.f32 %v1680, %v1776
    %v1809 = vmul.f32 %v1681, %v1777
    %v1810 = vmul.f32 %v1682, %v1778
    %v1811 = vmul.f32 %v1683, %v1779
    %1812 = vst [vmem:[#allocation8] sm:$0xff] %v1780
    %1813 = vst [vmem:[#allocation8 + $0x8] sm:$0xff] %v1781
    %1814 = vst [vmem:[#allocation8 + $0x10] sm:$0xff] %v1782
    %1815 = vst [vmem:[#allocation8 + $0x18] sm:$0xff] %v1783
    %1816 = vst [vmem:[#allocation8 + $0x20] sm:$0xff] %v1784
    %1817 = vst [vmem:[#allocation8 + $0x28] sm:$0xff] %v1785
    %1818 = vst [vmem:[#allocation8 + $0x30] sm:$0xff] %v1786
    %1819 = vst [vmem:[#allocation8 + $0x38] sm:$0xff] %v1787
    %1820 = vst [vmem:[#allocation8 + $0x40] sm:$0xff] %v1788
    %1821 = vst [vmem:[#allocation8 + $0x48] sm:$0xff] %v1789
    %1822 = vst [vmem:[#allocation8 + $0x50] sm:$0xff] %v1790
    %1823 = vst [vmem:[#allocation8 + $0x58] sm:$0xff] %v1791
    %1824 = vst [vmem:[#allocation8 + $0x60] sm:$0xff] %v1792
    %1825 = vst [vmem:[#allocation8 + $0x68] sm:$0xff] %v1793
    %1826 = vst [vmem:[#allocation8 + $0x70] sm:$0xff] %v1794
    %1827 = vst [vmem:[#allocation8 + $0x78] sm:$0xff] %v1795
    %1828 = vst [vmem:[#allocation8 + $0x80] sm:$0xff] %v1796
    %1829 = vst [vmem:[#allocation8 + $0x88] sm:$0xff] %v1797
    %1830 = vst [vmem:[#allocation8 + $0x90] sm:$0xff] %v1798
    %1831 = vst [vmem:[#allocation8 + $0x98] sm:$0xff] %v1799
    %1832 = vst [vmem:[#allocation8 + $0xa0] sm:$0xff] %v1800
    %1833 = vst [vmem:[#allocation8 + $0xa8] sm:$0xff] %v1801
    %1834 = vst [vmem:[#allocation8 + $0xb0] sm:$0xff] %v1802
    %1835 = vst [vmem:[#allocation8 + $0xb8] sm:$0xff] %v1803
    %1836 = vst [vmem:[#allocation8 + $0xc0] sm:$0xff] %v1804
    %1837 = vst [vmem:[#allocation8 + $0xc8] sm:$0xff] %v1805
    %1838 = vst [vmem:[#allocation8 + $0xd0] sm:$0xff] %v1806
    %1839 = vst [vmem:[#allocation8 + $0xd8] sm:$0xff] %v1807
    %1840 = vst [vmem:[#allocation8 + $0xe0] sm:$0xff] %v1808
    %1841 = vst [vmem:[#allocation8 + $0xe8] sm:$0xff] %v1809
    %1842 = vst [vmem:[#allocation8 + $0xf0] sm:$0xff] %v1810
    %1843 = vst [vmem:[#allocation8 + $0xf8] sm:$0xff] %v1811
    // Predicated region
    $region26: #{forward.1} parent=1 // pred_check
      _
    $region27: #{forward.1} parent=1 // pred_check_branch
      %1845 = sbr.rel (0) target = $region29
    $region28: #{forward.1} parent=1 // pred_region
      %s1847 = ssub.s32 4096, 4096
      %1848 = vsyncadd [#allocation4], %s1847
      %s1849 = sshll.u32 [#allocation8], 4
      %s1850 = int_to_ptr.vmem [resolvable:$true] %s1849
      %1855 = dma.vmem_to_hbm [thread:$0]  %s1850, 4096, %s3, [#allocation4], 512, 512, 32
    $region29: #{forward.1} parent=1 // pred_fallthru
      _
    // Predicated region
    $region30: #{forward.1} parent=1 // pred_check
      _
    $region31: #{forward.1} parent=1 // pred_check_branch
      %1857 = sbr.rel (0) target = $region33
    $region32: #{forward.1} parent=1 // pred_region
      %1858 = dma.done [#allocation4], 4096
    $region33: #{forward.1} parent=1 // pred_fallthru
      _
    %1859 = vsyncpa [#allocation3], 1
    %1860 = vsyncpa [#allocation6], 1
    %1861 = vsyncpa [#allocation4], 1

</llo_original>
